<compile_context>
chip_gen: v6e
topology: v6e:2x2x1
jax: 0.10.0
libtpu: 0.0.40
codegen_flags: <defaults>
</compile_context>

<pallas_src>
import functools

import jax
import jax.numpy as jnp
from jax.experimental import pallas as pl
from jax.experimental.pallas import tpu as pltpu


def _head_kernel(TH, W, Wp, Cin, C4, S,
                 xm_ref, xt_ref, xb_ref,
                 w1_ref, s1_ref, b1_ref,
                 w2_ref, s2_ref, b2_ref,
                 w3_ref, b3_ref,
                 out_ref, xs_ref):
    s = pl.program_id(1)
    R = TH * Wp
    act_dt = xs_ref.dtype                                     # bf16

    # ---- assemble the zero-padded (TH+2, Wp, Cin) strip in VMEM ------------
    # Real pixels live at columns [0, W); columns [W, Wp) are a shared zero
    # pad for every row (including halos).  The 3x3 left-pad read of column 0
    # wraps -- via the row-major flat index -- into the previous row's zero
    # pad, so no dedicated left-pad column is needed and all stores below are
    # sublane-aligned (no shifted relayout of the Cin-wide input).
    xs_ref[:, W:Wp, :] = jnp.zeros((TH + 2, Wp - W, Cin), act_dt)
    xs_ref[1:TH + 1, 0:W, :] = xm_ref[0]
    top = xt_ref[0]
    bot = xb_ref[0]
    xs_ref[0:1, 0:W, :] = jnp.where(s > 0, top, jnp.zeros_like(top))
    xs_ref[TH + 1:TH + 2, 0:W, :] = jnp.where(s < S - 1, bot,
                                              jnp.zeros_like(bot))

    # ---- conv1: 3x3, pad 1, no bias ----------------------------------------
    # dx taps fused along output columns:
    #   acc3[p, dx*C4 + c] = sum_dy xflat_dy[p, :] @ w1[dy, :, dx*C4 + c]
    #   out[p, c]          = acc3[p-1, 0:C4] + acc3[p, C4:2C4] + acc3[p+1, 2C4:]
    # dy offsets are whole strip rows -> tile-aligned, copy-free slices;
    # the dx shifts wrap only onto zeroed pad columns / discarded outputs.
    xf0 = xs_ref[0:TH, :, :].reshape(R, Cin)                   # aligned, free
    acc3 = jnp.dot(xf0, w1_ref[0], preferred_element_type=jnp.float32)
    for dy in (1, 2):
        xf_dy = xs_ref[dy:dy + TH, :, :].reshape(R, Cin)
        acc3 = acc3 + jnp.dot(xf_dy, w1_ref[dy],
                              preferred_element_type=jnp.float32)
    z0 = acc3[:, 0:C4]
    z1 = acc3[:, C4:2 * C4]
    z2 = acc3[:, 2 * C4:3 * C4]
    z0 = jnp.concatenate([z0[R - 1:], z0[:R - 1]], axis=0)     # z0[p] <- z0[p-1]
    z2 = jnp.concatenate([z2[1:], z2[:1]], axis=0)             # z2[p] <- z2[p+1]
    acc = z0 + z1 + z2                                         # (R, C4) f32

    # ---- folded BatchNorm1 (eval) + ReLU ------------------------------------
    y1 = jnp.maximum(acc * s1_ref[...] + b1_ref[...], 0.0)     # (R, C4) f32

    # ---- conv_transpose2 (k=s=2): 4 disjoint taps fused into one matmul -----
    q = jnp.dot(y1.astype(act_dt), w2_ref[...],
                preferred_element_type=jnp.float32)            # (R, 4*C4)
    q = jnp.maximum(q * s2_ref[...] + b2_ref[...], 0.0)        # BN2 + ReLU

    # ---- conv_transpose3 (k=s=2, Cout=1): block-diagonal matmul + sigmoid ---
    r = jnp.dot(q.astype(act_dt), w3_ref[...],
                preferred_element_type=jnp.float32) + b3_ref[...]
    out_ref[0, 0] = jax.nn.sigmoid(r)                          # (R, 16) store


def _pick_tile_h(H, Wp, Cin, budget_bytes=2 << 20):
    divisors = [d for d in range(1, H + 1) if H % d == 0]
    fitting = [d for d in divisors if (d + 2) * Wp * Cin * 2 <= budget_bytes]
    return max(fitting) if fitting else divisors[0]


def db_head_forward(x_nchw, params, *, tile_h=None):
    """Equivalent of Head.forward(x) (return_f=False). Input NCHW, output NCHW (C=1)."""
    N, Cin, H, W = x_nchw.shape
    assert Cin % 4 == 0, "in_channels must be divisible by 4"
    C4 = Cin // 4
    eps = 1e-5

    # padded width: >= W+1 and a multiple of 16 so the bf16 row-slices /
    # reshapes inside the kernel stay tile-aligned (copy-free)
    Wp = ((W + 1 + 15) // 16) * 16
    if tile_h is None:
        tile_h = _pick_tile_h(H, Wp, Cin)
    TH = tile_h
    assert H % TH == 0, "H must be divisible by tile_h"
    # TODO(synk): support a ragged last strip (H % tile_h != 0) via masking.
    S = H // TH
    R = TH * Wp

    # NCHW -> NHWC + bf16 cast: layout plumbing only (single fused XLA pass).
    x = jnp.transpose(x_nchw, (0, 2, 3, 1)).astype(jnp.bfloat16)

    # conv1 weight (C4, Cin, 3, 3) -> (3, Cin, 3*C4): w1[dy][cin, dx*C4 + c]
    w1 = jnp.transpose(params["conv1_w"], (2, 1, 3, 0)).reshape(3, Cin, 3 * C4)
    w1 = w1.astype(jnp.bfloat16)

    # fold BN1 (eval-mode running stats); conv1 has no bias
    s1 = params["bn1_gamma"] / jnp.sqrt(params["bn1_var"] + eps)
    b1 = params["bn1_beta"] - params["bn1_mean"] * s1
    s1 = s1.reshape(1, C4).astype(jnp.float32)
    b1 = b1.reshape(1, C4).astype(jnp.float32)

    # conv2 (ConvTranspose, k=s=2): taps t=di*2+dj fused along output columns
    w2c = jnp.transpose(params["conv2_w"], (0, 2, 3, 1)).reshape(C4, 4 * C4)
    w2c = w2c.astype(jnp.bfloat16)
    s2 = params["bn2_gamma"] / jnp.sqrt(params["bn2_var"] + eps)
    b2 = (params["conv2_b"] - params["bn2_mean"]) * s2 + params["bn2_beta"]
    s2c = jnp.tile(s2, 4).reshape(1, 4 * C4).astype(jnp.float32)
    b2c = jnp.tile(b2, 4).reshape(1, 4 * C4).astype(jnp.float32)

    # conv3 (ConvTranspose, k=s=2, Cout=1): block-diagonal weight (4*C4, 16),
    # output column k = t*4 + (ei*2+ej) = di*8 + dj*4 + ei*2 + ej
    w3tap = params["conv3_w"][:, 0, :, :].reshape(C4, 4)
    w3bd = jnp.kron(jnp.eye(4, dtype=w3tap.dtype), w3tap).astype(jnp.bfloat16)
    b3 = jnp.full((1, 16), params["conv3_b"][0], jnp.float32)

    # explicit VMEM budget sized from the tiled buffers (with headroom)
    est = (2 * TH * W * Cin * 2          # main input block, double-buffered
           + 4 * W * Cin * 2             # halo rows, double-buffered
           + 2 * R * 16 * 4              # output block, double-buffered
           + (TH + 2) * Wp * Cin * 2     # scratch strip
           + R * Cin * 2                 # one dy row-slice (upper bound)
           + 2 * R * 3 * C4 * 4          # acc3 + column-group temporaries
           + 3 * R * C4 * 4              # rolled z's / y1
           + 2 * R * 4 * C4 * 4          # q (f32 + bf16)
           + 2 * R * 16 * 4)             # r / sigmoid
    vmem_limit = int(min(max(2 * est, 32 * 2 ** 20), 64 * 2 ** 20))

    kernel = functools.partial(_head_kernel, TH, W, Wp, Cin, C4, S)

    out_flat = pl.pallas_call(
        kernel,
        out_shape=jax.ShapeDtypeStruct((N, S, R, 16), jnp.float32),
        grid_spec=pltpu.PrefetchScalarGridSpec(
            num_scalar_prefetch=0,
            grid=(N, S),
            in_specs=[
                # non-overlapping main strip
                pl.BlockSpec((1, TH, W, Cin), lambda n, s: (n, s, 0, 0)),
                # 1-row halos (same HBM array; clamped row index, masked in-kernel)
                pl.BlockSpec((1, 1, W, Cin),
                             lambda n, s: (n, jnp.maximum(s * TH - 1, 0), 0, 0)),
                pl.BlockSpec((1, 1, W, Cin),
                             lambda n, s: (n, jnp.minimum((s + 1) * TH, H - 1), 0, 0)),
                pl.BlockSpec((3, Cin, 3 * C4), lambda n, s: (0, 0, 0)),
                pl.BlockSpec((1, C4), lambda n, s: (0, 0)),
                pl.BlockSpec((1, C4), lambda n, s: (0, 0)),
                pl.BlockSpec((C4, 4 * C4), lambda n, s: (0, 0)),
                pl.BlockSpec((1, 4 * C4), lambda n, s: (0, 0)),
                pl.BlockSpec((1, 4 * C4), lambda n, s: (0, 0)),
                pl.BlockSpec((4 * C4, 16), lambda n, s: (0, 0)),
                pl.BlockSpec((1, 16), lambda n, s: (0, 0)),
            ],
            out_specs=pl.BlockSpec((1, 1, R, 16), lambda n, s: (n, s, 0, 0)),
            scratch_shapes=[pltpu.VMEM((TH + 2, Wp, Cin), jnp.bfloat16)],
        ),
        compiler_params=pltpu.CompilerParams(
            dimension_semantics=("parallel", "parallel"),
            vmem_limit_bytes=vmem_limit),
    )(x, x, x, w1, s1, b1, w2c, s2c, b2c, w3bd, b3)

    # crop width padding and de-interleave: channel k = di*8 + dj*4 + ei*2 + ej
    out = out_flat.reshape(N, S, TH, Wp, 2, 2, 2, 2)[:, :, :, :W]
    out = out.reshape(N, H, W, 2, 2, 2, 2)          # (n, i, j, di, dj, ei, ej)
    out = jnp.transpose(out, (0, 1, 3, 5, 2, 4, 6)) # (n, i, di, ei, j, dj, ej)
    out = out.reshape(N, 4 * H, 4 * W)
    return out[:, None, :, :]                       # NCHW, C = 1


def init_params(key, in_channels):
    """Deterministic synthetic parameters, PyTorch-convention shapes."""
    C4 = in_channels // 4
    ks = jax.random.split(key, 12)

    def u(k, shape, scale=0.3):
        return jax.random.uniform(k, shape, jnp.float32, -scale, scale)

    return dict(
        conv1_w=u(ks[0], (C4, in_channels, 3, 3)),
        bn1_gamma=1.0 + 0.1 * jax.random.normal(ks[1], (C4,), jnp.float32),
        bn1_beta=0.1 * jax.random.normal(ks[2], (C4,), jnp.float32),
        bn1_mean=0.1 * jax.random.normal(ks[3], (C4,), jnp.float32),
        bn1_var=jnp.abs(jax.random.normal(ks[4], (C4,), jnp.float32)) + 0.5,
        conv2_w=u(ks[5], (C4, C4, 2, 2)),
        conv2_b=u(ks[6], (C4,)),
        bn2_gamma=1.0 + 0.1 * jax.random.normal(ks[7], (C4,), jnp.float32),
        bn2_beta=0.1 * jax.random.normal(ks[8], (C4,), jnp.float32),
        bn2_mean=0.1 * jax.random.normal(ks[9], (C4,), jnp.float32),
        bn2_var=jnp.abs(jax.random.normal(ks[10], (C4,), jnp.float32)) + 0.5,
        conv3_w=u(ks[11], (C4, 1, 2, 2)),
        conv3_b=jnp.array([0.05], jnp.float32),
    )


def reference_forward(x, p):
    """Pure-JAX (XLA, f32) reference of Head.forward with eval-mode BatchNorm."""
    eps = 1e-5
    y = jax.lax.conv_general_dilated(
        x, p["conv1_w"], (1, 1), ((1, 1), (1, 1)),
        dimension_numbers=("NCHW", "OIHW", "NCHW"))
    s1 = p["bn1_gamma"] / jnp.sqrt(p["bn1_var"] + eps)
    y = (y - p["bn1_mean"][None, :, None, None]) * s1[None, :, None, None] \
        + p["bn1_beta"][None, :, None, None]
    y = jax.nn.relu(y)

    def conv_t_2x2(z, w, b):
        # z: (N, Ci, H, W), w: (Ci, Co, 2, 2); k == stride == 2, no padding.
        n, ci, h, wd = z.shape
        co = w.shape[1]
        t = jnp.einsum("ncij,codk->noidjk", z, w)       # (N, Co, H, 2, W, 2)
        t = t.reshape(n, co, 2 * h, 2 * wd)
        return t + b[None, :, None, None]

    y = conv_t_2x2(y, p["conv2_w"], p["conv2_b"])
    s2 = p["bn2_gamma"] / jnp.sqrt(p["bn2_var"] + eps)
    y = (y - p["bn2_mean"][None, :, None, None]) * s2[None, :, None, None] \
        + p["bn2_beta"][None, :, None, None]
    y = jax.nn.relu(y)
    y = conv_t_2x2(y, p["conv3_w"], p["conv3_b"])
    return jax.nn.sigmoid(y)


if __name__ == "__main__":
    key = jax.random.PRNGKey(0)
    k_x, k_p = jax.random.split(key)

    N, Cin, H, W = 2, 16, 16, 16          # in_channels must be divisible by 4
    x = jax.random.normal(k_x, (N, Cin, H, W), jnp.float32)
    params = init_params(k_p, Cin)

    out = jax.block_until_ready(db_head_forward(x, params, tile_h=8))
    assert out.shape == (N, 1, 4 * H, 4 * W), out.shape

    ref = reference_forward(x, params)
    max_err = float(jnp.max(jnp.abs(out - ref)))
    # bf16 MXU path vs f32 reference -> bf16-appropriate tolerance on a [0,1] map
    assert max_err < 2e-2, max_err

    print("KERNEL_OK")
</pallas_src>

<mosaic_0001>
module attributes {stable_mosaic.version = 11 : i64} {
  func.func @_head_kernel(%arg0: i32, %arg1: i32, %arg2: memref<1x8x16x16xbf16, #tpu.memory_space<vmem>>, %arg3: memref<1x1x16x16xbf16, #tpu.memory_space<vmem>>, %arg4: memref<1x1x16x16xbf16, #tpu.memory_space<vmem>>, %arg5: memref<3x16x12xbf16, #tpu.memory_space<vmem>>, %arg6: memref<1x4xf32, #tpu.memory_space<vmem>>, %arg7: memref<1x4xf32, #tpu.memory_space<vmem>>, %arg8: memref<4x16xbf16, #tpu.memory_space<vmem>>, %arg9: memref<1x16xf32, #tpu.memory_space<vmem>>, %arg10: memref<1x16xf32, #tpu.memory_space<vmem>>, %arg11: memref<16x16xbf16, #tpu.memory_space<vmem>>, %arg12: memref<1x16xf32, #tpu.memory_space<vmem>>, %arg13: memref<1x1x256x16xf32, #tpu.memory_space<vmem>>, %arg14: memref<10x32x16xbf16, #tpu.memory_space<vmem>>) attributes {dimension_semantics = [#tpu.dimension_semantics<parallel>, #tpu.dimension_semantics<parallel>], iteration_bounds = array<i64: 2, 2>, scalar_prefetch = 0 : i64, scratch_operands = 1 : i64, tpu.core_type = #tpu.core_type<tc>, window_params = [{transform_indices = @transform_0, window_bounds = array<i64: 1, 8, 16, 16>}, {transform_indices = @transform_1, window_bounds = array<i64: 1, 1, 16, 16>}, {transform_indices = @transform_2, window_bounds = array<i64: 1, 1, 16, 16>}, {pipeline_mode = #tpu.pipeline_mode<synchronous>, transform_indices = @transform_3, window_bounds = array<i64: 3, 16, 12>}, {pipeline_mode = #tpu.pipeline_mode<synchronous>, transform_indices = @transform_4, window_bounds = array<i64: 1, 4>}, {pipeline_mode = #tpu.pipeline_mode<synchronous>, transform_indices = @transform_5, window_bounds = array<i64: 1, 4>}, {pipeline_mode = #tpu.pipeline_mode<synchronous>, transform_indices = @transform_6, window_bounds = array<i64: 4, 16>}, {pipeline_mode = #tpu.pipeline_mode<synchronous>, transform_indices = @transform_7, window_bounds = array<i64: 1, 16>}, {pipeline_mode = #tpu.pipeline_mode<synchronous>, transform_indices = @transform_8, window_bounds = array<i64: 1, 16>}, {pipeline_mode = #tpu.pipeline_mode<synchronous>, transform_indices = @transform_9, window_bounds = array<i64: 16, 16>}, {pipeline_mode = #tpu.pipeline_mode<synchronous>, transform_indices = @transform_10, window_bounds = array<i64: 1, 16>}, {transform_indices = @transform_11, window_bounds = array<i64: 1, 1, 256, 16>}]} {
    %cst = arith.constant 0.000000e+00 : bf16
    %0 = vector.broadcast %cst : bf16 to vector<10x16x16xbf16>
    %c0 = arith.constant 0 : index
    %c16 = arith.constant 16 : index
    %c0_0 = arith.constant 0 : index
    %1 = vector.load %arg14[%c0, %c16, %c0_0] : memref<10x32x16xbf16, #tpu.memory_space<vmem>>, vector<10x16x16xbf16>
    tpu.vector_store %arg14[%c0, %c16, %c0_0], %0 {strides = array<i32>} : memref<10x32x16xbf16, #tpu.memory_space<vmem>>, vector<10x16x16xbf16>,
    %c0_1 = arith.constant 0 : index
    %c0_2 = arith.constant 0 : index
    %c0_3 = arith.constant 0 : index
    %c0_4 = arith.constant 0 : index
    %2 = vector.load %arg2[%c0_1, %c0_2, %c0_3, %c0_4] : memref<1x8x16x16xbf16, #tpu.memory_space<vmem>>, vector<1x8x16x16xbf16>
    %3 = vector.shape_cast %2 : vector<1x8x16x16xbf16> to vector<8x16x16xbf16>
    %c1 = arith.constant 1 : index
    %c0_5 = arith.constant 0 : index
    %c0_6 = arith.constant 0 : index
    %4 = vector.load %arg14[%c1, %c0_5, %c0_6] : memref<10x32x16xbf16, #tpu.memory_space<vmem>>, vector<8x16x16xbf16>
    tpu.vector_store %arg14[%c1, %c0_5, %c0_6], %3 {strides = array<i32>} : memref<10x32x16xbf16, #tpu.memory_space<vmem>>, vector<8x16x16xbf16>,
    %c0_7 = arith.constant 0 : index
    %c0_8 = arith.constant 0 : index
    %c0_9 = arith.constant 0 : index
    %c0_10 = arith.constant 0 : index
    %5 = vector.load %arg3[%c0_7, %c0_8, %c0_9, %c0_10] : memref<1x1x16x16xbf16, #tpu.memory_space<vmem>>, vector<1x1x16x16xbf16>
    %6 = vector.shape_cast %5 : vector<1x1x16x16xbf16> to vector<1x16x16xbf16>
    %c0_11 = arith.constant 0 : index
    %c0_12 = arith.constant 0 : index
    %c0_13 = arith.constant 0 : index
    %c0_14 = arith.constant 0 : index
    %7 = vector.load %arg4[%c0_11, %c0_12, %c0_13, %c0_14] : memref<1x1x16x16xbf16, #tpu.memory_space<vmem>>, vector<1x1x16x16xbf16>
    %8 = vector.shape_cast %7 : vector<1x1x16x16xbf16> to vector<1x16x16xbf16>
    %c0_i32 = arith.constant 0 : i32
    %9 = arith.cmpi sgt, %arg1, %c0_i32 : i32
    %cst_15 = arith.constant 0.000000e+00 : bf16
    %10 = vector.broadcast %cst_15 : bf16 to vector<1x16x16xbf16>
    %11 = arith.select %9, %6, %10 : vector<1x16x16xbf16>
    %c0_16 = arith.constant 0 : index
    %c0_17 = arith.constant 0 : index
    %c0_18 = arith.constant 0 : index
    %12 = vector.load %arg14[%c0_16, %c0_17, %c0_18] : memref<10x32x16xbf16, #tpu.memory_space<vmem>>, vector<1x16x16xbf16>
    tpu.vector_store %arg14[%c0_16, %c0_17, %c0_18], %11 {strides = array<i32>} : memref<10x32x16xbf16, #tpu.memory_space<vmem>>, vector<1x16x16xbf16>,
    %c1_i32 = arith.constant 1 : i32
    %13 = arith.cmpi slt, %arg1, %c1_i32 : i32
    %cst_19 = arith.constant 0.000000e+00 : bf16
    %14 = vector.broadcast %cst_19 : bf16 to vector<1x16x16xbf16>
    %15 = arith.select %13, %8, %14 : vector<1x16x16xbf16>
    %c9 = arith.constant 9 : index
    %c0_20 = arith.constant 0 : index
    %c0_21 = arith.constant 0 : index
    %16 = vector.load %arg14[%c9, %c0_20, %c0_21] : memref<10x32x16xbf16, #tpu.memory_space<vmem>>, vector<1x16x16xbf16>
    tpu.vector_store %arg14[%c9, %c0_20, %c0_21], %15 {strides = array<i32>} : memref<10x32x16xbf16, #tpu.memory_space<vmem>>, vector<1x16x16xbf16>,
    %c0_22 = arith.constant 0 : index
    %c0_23 = arith.constant 0 : index
    %c0_24 = arith.constant 0 : index
    %17 = vector.load %arg14[%c0_22, %c0_23, %c0_24] : memref<10x32x16xbf16, #tpu.memory_space<vmem>>, vector<8x32x16xbf16>
    %18 = vector.shape_cast %17 : vector<8x32x16xbf16> to vector<256x16xbf16>
    %c0_25 = arith.constant 0 : index
    %c0_26 = arith.constant 0 : index
    %c0_27 = arith.constant 0 : index
    %19 = vector.load %arg5[%c0_25, %c0_26, %c0_27] : memref<3x16x12xbf16, #tpu.memory_space<vmem>>, vector<1x16x12xbf16>
    %20 = vector.shape_cast %19 : vector<1x16x12xbf16> to vector<16x12xbf16>
    %cst_28 = arith.constant dense<0.000000e+00> : vector<256x12xf32>
    %21 = tpu.matmul %18, %20, %cst_28 {dimension_numbers = #tpu.dot_dimension_numbers<[1], [0], [0], [1], [0, 0, 1, 1], [], []>} : vector<256x16xbf16>, vector<16x12xbf16>, vector<256x12xf32> -> vector<256x12xf32>
    %c1_29 = arith.constant 1 : index
    %c0_30 = arith.constant 0 : index
    %c0_31 = arith.constant 0 : index
    %22 = vector.load %arg14[%c1_29, %c0_30, %c0_31] : memref<10x32x16xbf16, #tpu.memory_space<vmem>>, vector<8x32x16xbf16>
    %23 = vector.shape_cast %22 : vector<8x32x16xbf16> to vector<256x16xbf16>
    %c1_32 = arith.constant 1 : index
    %c0_33 = arith.constant 0 : index
    %c0_34 = arith.constant 0 : index
    %24 = vector.load %arg5[%c1_32, %c0_33, %c0_34] : memref<3x16x12xbf16, #tpu.memory_space<vmem>>, vector<1x16x12xbf16>
    %25 = vector.shape_cast %24 : vector<1x16x12xbf16> to vector<16x12xbf16>
    %cst_35 = arith.constant dense<0.000000e+00> : vector<256x12xf32>
    %26 = tpu.matmul %23, %25, %cst_35 {dimension_numbers = #tpu.dot_dimension_numbers<[1], [0], [0], [1], [0, 0, 1, 1], [], []>} : vector<256x16xbf16>, vector<16x12xbf16>, vector<256x12xf32> -> vector<256x12xf32>
    %27 = arith.addf %21, %26 : vector<256x12xf32>
    %c2 = arith.constant 2 : index
    %c0_36 = arith.constant 0 : index
    %c0_37 = arith.constant 0 : index
    %28 = vector.load %arg14[%c2, %c0_36, %c0_37] : memref<10x32x16xbf16, #tpu.memory_space<vmem>>, vector<8x32x16xbf16>
    %29 = vector.shape_cast %28 : vector<8x32x16xbf16> to vector<256x16xbf16>
    %c2_38 = arith.constant 2 : index
    %c0_39 = arith.constant 0 : index
    %c0_40 = arith.constant 0 : index
    %30 = vector.load %arg5[%c2_38, %c0_39, %c0_40] : memref<3x16x12xbf16, #tpu.memory_space<vmem>>, vector<1x16x12xbf16>
    %31 = vector.shape_cast %30 : vector<1x16x12xbf16> to vector<16x12xbf16>
    %cst_41 = arith.constant dense<0.000000e+00> : vector<256x12xf32>
    %32 = tpu.matmul %29, %31, %cst_41 {dimension_numbers = #tpu.dot_dimension_numbers<[1], [0], [0], [1], [0, 0, 1, 1], [], []>} : vector<256x16xbf16>, vector<16x12xbf16>, vector<256x12xf32> -> vector<256x12xf32>
    %33 = arith.addf %27, %32 : vector<256x12xf32>
    %34 = vector.extract_strided_slice %33 {offsets = [0, 0], sizes = [256, 4], strides = [1, 1]} : vector<256x12xf32> to vector<256x4xf32>
    %35 = vector.extract_strided_slice %33 {offsets = [0, 4], sizes = [256, 4], strides = [1, 1]} : vector<256x12xf32> to vector<256x4xf32>
    %36 = vector.extract_strided_slice %33 {offsets = [0, 8], sizes = [256, 4], strides = [1, 1]} : vector<256x12xf32> to vector<256x4xf32>
    %37 = vector.extract_strided_slice %34 {offsets = [255, 0], sizes = [1, 4], strides = [1, 1]} : vector<256x4xf32> to vector<1x4xf32>
    %38 = vector.extract_strided_slice %34 {offsets = [0, 0], sizes = [255, 4], strides = [1, 1]} : vector<256x4xf32> to vector<255x4xf32>
    %39 = tpu.concatenate %37, %38 in 0 : vector<1x4xf32>, vector<255x4xf32> -> vector<256x4xf32>
    %40 = vector.extract_strided_slice %36 {offsets = [1, 0], sizes = [255, 4], strides = [1, 1]} : vector<256x4xf32> to vector<255x4xf32>
    %41 = vector.extract_strided_slice %36 {offsets = [0, 0], sizes = [1, 4], strides = [1, 1]} : vector<256x4xf32> to vector<1x4xf32>
    %42 = tpu.concatenate %40, %41 in 0 : vector<255x4xf32>, vector<1x4xf32> -> vector<256x4xf32>
    %43 = arith.addf %39, %35 : vector<256x4xf32>
    %44 = arith.addf %43, %42 : vector<256x4xf32>
    %c0_42 = arith.constant 0 : index
    %c0_43 = arith.constant 0 : index
    %45 = vector.load %arg6[%c0_42, %c0_43] : memref<1x4xf32, #tpu.memory_space<vmem>>, vector<1x4xf32>
    %46 = vector.broadcast %45 : vector<1x4xf32> to vector<256x4xf32>
    %47 = arith.mulf %44, %46 : vector<256x4xf32>
    %c0_44 = arith.constant 0 : index
    %c0_45 = arith.constant 0 : index
    %48 = vector.load %arg7[%c0_44, %c0_45] : memref<1x4xf32, #tpu.memory_space<vmem>>, vector<1x4xf32>
    %49 = vector.broadcast %48 : vector<1x4xf32> to vector<256x4xf32>
    %50 = arith.addf %47, %49 : vector<256x4xf32>
    %cst_46 = arith.constant 0.000000e+00 : f32
    %51 = vector.broadcast %cst_46 : f32 to vector<256x4xf32>
    %52 = arith.maximumf %50, %51 : vector<256x4xf32>
    %53 = arith.truncf %52 : vector<256x4xf32> to vector<256x4xbf16>
    %c0_47 = arith.constant 0 : index
    %c0_48 = arith.constant 0 : index
    %54 = vector.load %arg8[%c0_47, %c0_48] : memref<4x16xbf16, #tpu.memory_space<vmem>>, vector<4x16xbf16>
    %cst_49 = arith.constant dense<0.000000e+00> : vector<256x16xf32>
    %55 = tpu.matmul %53, %54, %cst_49 {dimension_numbers = #tpu.dot_dimension_numbers<[1], [0], [0], [1], [0, 0, 1, 1], [], []>} : vector<256x4xbf16>, vector<4x16xbf16>, vector<256x16xf32> -> vector<256x16xf32>
    %c0_50 = arith.constant 0 : index
    %c0_51 = arith.constant 0 : index
    %56 = vector.load %arg9[%c0_50, %c0_51] : memref<1x16xf32, #tpu.memory_space<vmem>>, vector<1x16xf32>
    %57 = vector.broadcast %56 : vector<1x16xf32> to vector<256x16xf32>
    %58 = arith.mulf %55, %57 : vector<256x16xf32>
    %c0_52 = arith.constant 0 : index
    %c0_53 = arith.constant 0 : index
    %59 = vector.load %arg10[%c0_52, %c0_53] : memref<1x16xf32, #tpu.memory_space<vmem>>, vector<1x16xf32>
    %60 = vector.broadcast %59 : vector<1x16xf32> to vector<256x16xf32>
    %61 = arith.addf %58, %60 : vector<256x16xf32>
    %cst_54 = arith.constant 0.000000e+00 : f32
    %62 = vector.broadcast %cst_54 : f32 to vector<256x16xf32>
    %63 = arith.maximumf %61, %62 : vector<256x16xf32>
    %64 = arith.truncf %63 : vector<256x16xf32> to vector<256x16xbf16>
    %c0_55 = arith.constant 0 : index
    %c0_56 = arith.constant 0 : index
    %65 = vector.load %arg11[%c0_55, %c0_56] : memref<16x16xbf16, #tpu.memory_space<vmem>>, vector<16x16xbf16>
    %cst_57 = arith.constant dense<0.000000e+00> : vector<256x16xf32>
    %66 = tpu.matmul %64, %65, %cst_57 {dimension_numbers = #tpu.dot_dimension_numbers<[1], [0], [0], [1], [0, 0, 1, 1], [], []>} : vector<256x16xbf16>, vector<16x16xbf16>, vector<256x16xf32> -> vector<256x16xf32>
    %c0_58 = arith.constant 0 : index
    %c0_59 = arith.constant 0 : index
    %67 = vector.load %arg12[%c0_58, %c0_59] : memref<1x16xf32, #tpu.memory_space<vmem>>, vector<1x16xf32>
    %68 = vector.broadcast %67 : vector<1x16xf32> to vector<256x16xf32>
    %69 = arith.addf %66, %68 : vector<256x16xf32>
    %70 = arith.negf %69 : vector<256x16xf32>
    %71 = math.exp %70 : vector<256x16xf32>
    %cst_60 = arith.constant 1.000000e+00 : f32
    %72 = vector.broadcast %cst_60 : f32 to vector<256x16xf32>
    %73 = arith.addf %72, %71 : vector<256x16xf32>
    %74 = arith.divf %72, %73 : vector<256x16xf32>
    %c0_61 = arith.constant 0 : index
    %c0_62 = arith.constant 0 : index
    %c0_63 = arith.constant 0 : index
    %c0_64 = arith.constant 0 : index
    %75 = vector.load %arg13[%c0_61, %c0_62, %c0_63, %c0_64] : memref<1x1x256x16xf32, #tpu.memory_space<vmem>>, vector<1x1x256x16xf32>
    %76 = vector.shape_cast %75 : vector<1x1x256x16xf32> to vector<256x16xf32>
    %77 = vector.shape_cast %74 : vector<256x16xf32> to vector<1x1x256x16xf32>
    tpu.vector_store %arg13[%c0_61, %c0_62, %c0_63, %c0_64], %77 {strides = array<i32>} : memref<1x1x256x16xf32, #tpu.memory_space<vmem>>, vector<1x1x256x16xf32>,
    return
  }
  func.func @transform_0(%arg0: i32, %arg1: i32) -> (i32, i32, i32, i32) {
    %c0_i32 = arith.constant 0 : i32
    %c0_i32_0 = arith.constant 0 : i32
    %c0_i32_1 = arith.constant 0 : i32
    return %arg0, %arg1, %c0_i32, %c0_i32_0 : i32, i32, i32, i32
  }
  func.func @transform_1(%arg0: i32, %arg1: i32) -> (i32, i32, i32, i32) {
    %c8_i32 = arith.constant 8 : i32
    %0 = arith.muli %arg1, %c8_i32 : i32
    %c1_i32 = arith.constant 1 : i32
    %1 = arith.subi %0, %c1_i32 : i32
    %c0_i32 = arith.constant 0 : i32
    %2 = arith.maxsi %1, %c0_i32 : i32
    %c0_i32_0 = arith.constant 0 : i32
    %c0_i32_1 = arith.constant 0 : i32
    %c0_i32_2 = arith.constant 0 : i32
    return %arg0, %2, %c0_i32_0, %c0_i32_1 : i32, i32, i32, i32
  }
  func.func @transform_2(%arg0: i32, %arg1: i32) -> (i32, i32, i32, i32) {
    %c1_i32 = arith.constant 1 : i32
    %0 = arith.addi %arg1, %c1_i32 : i32
    %c8_i32 = arith.constant 8 : i32
    %1 = arith.muli %0, %c8_i32 : i32
    %c15_i32 = arith.constant 15 : i32
    %2 = arith.minsi %1, %c15_i32 : i32
    %c0_i32 = arith.constant 0 : i32
    %c0_i32_0 = arith.constant 0 : i32
    %c0_i32_1 = arith.constant 0 : i32
    return %arg0, %2, %c0_i32, %c0_i32_0 : i32, i32, i32, i32
  }
  func.func @transform_3(%arg0: i32, %arg1: i32) -> (i32, i32, i32) {
    %c0_i32 = arith.constant 0 : i32
    %c0_i32_0 = arith.constant 0 : i32
    %c0_i32_1 = arith.constant 0 : i32
    %c0_i32_2 = arith.constant 0 : i32
    return %c0_i32, %c0_i32_0, %c0_i32_1 : i32, i32, i32
  }
  func.func @transform_4(%arg0: i32, %arg1: i32) -> (i32, i32) {
    %c0_i32 = arith.constant 0 : i32
    %c0_i32_0 = arith.constant 0 : i32
    %c0_i32_1 = arith.constant 0 : i32
    return %c0_i32, %c0_i32_0 : i32, i32
  }
  func.func @transform_5(%arg0: i32, %arg1: i32) -> (i32, i32) {
    %c0_i32 = arith.constant 0 : i32
    %c0_i32_0 = arith.constant 0 : i32
    %c0_i32_1 = arith.constant 0 : i32
    return %c0_i32, %c0_i32_0 : i32, i32
  }
  func.func @transform_6(%arg0: i32, %arg1: i32) -> (i32, i32) {
    %c0_i32 = arith.constant 0 : i32
    %c0_i32_0 = arith.constant 0 : i32
    %c0_i32_1 = arith.constant 0 : i32
    return %c0_i32, %c0_i32_0 : i32, i32
  }
  func.func @transform_7(%arg0: i32, %arg1: i32) -> (i32, i32) {
    %c0_i32 = arith.constant 0 : i32
    %c0_i32_0 = arith.constant 0 : i32
    %c0_i32_1 = arith.constant 0 : i32
    return %c0_i32, %c0_i32_0 : i32, i32
  }
  func.func @transform_8(%arg0: i32, %arg1: i32) -> (i32, i32) {
    %c0_i32 = arith.constant 0 : i32
    %c0_i32_0 = arith.constant 0 : i32
    %c0_i32_1 = arith.constant 0 : i32
    return %c0_i32, %c0_i32_0 : i32, i32
  }
  func.func @transform_9(%arg0: i32, %arg1: i32) -> (i32, i32) {
    %c0_i32 = arith.constant 0 : i32
    %c0_i32_0 = arith.constant 0 : i32
    %c0_i32_1 = arith.constant 0 : i32
    return %c0_i32, %c0_i32_0 : i32, i32
  }
  func.func @transform_10(%arg0: i32, %arg1: i32) -> (i32, i32) {
    %c0_i32 = arith.constant 0 : i32
    %c0_i32_0 = arith.constant 0 : i32
    %c0_i32_1 = arith.constant 0 : i32
    return %c0_i32, %c0_i32_0 : i32, i32
  }
  func.func @transform_11(%arg0: i32, %arg1: i32) -> (i32, i32, i32, i32) {
    %c0_i32 = arith.constant 0 : i32
    %c0_i32_0 = arith.constant 0 : i32
    %c0_i32_1 = arith.constant 0 : i32
    return %arg0, %arg1, %c0_i32, %c0_i32_0 : i32, i32, i32, i32
  }
}

</mosaic_0001>

<llo_original>
// kernel: tpu_custom_call.1
$region0: #{tpu_custom_call.1}
  #allocation0 [shape = 'u32[]', space=smem, size = 0x4, offset = 0x4, fixed_abs, tag = 'smem constant byte address 0x4 - core index']
  #allocation1 [shape = 'u32[144,128]{1,0:T(1,128)}', space=vmem, size = 0x12000, scoped, tag = 'internal scratch']
  #allocation2 [shape = 'bf16[10,32,16]{2,1,0:T(8,128)(2,1)}', space=vmem, size = 0x14000, scoped, tag = 'scratch operand']
  %s0 = inlined_call_operand.hbm [shape: bf16[2,16,16,16], index: 0, kind: input, shape index: {}]
  %s1 = inlined_call_operand.hbm [shape: bf16[2,16,16,16], index: 1, kind: input, shape index: {}]
  %s2 = inlined_call_operand.hbm [shape: bf16[2,16,16,16], index: 2, kind: input, shape index: {}]
  %s3 = inlined_call_operand.hbm [shape: bf16[3,16,12], index: 3, kind: input, shape index: {}]
  %s4 = inlined_call_operand.vmem [shape: f32[1,4], index: 4, kind: input, shape index: {}]
  %s5 = inlined_call_operand.vmem [shape: f32[1,4], index: 5, kind: input, shape index: {}]
  %s6 = inlined_call_operand.vmem [shape: bf16[4,16], index: 6, kind: input, shape index: {}]
  %s7 = inlined_call_operand.vmem [shape: f32[1,16], index: 7, kind: input, shape index: {}]
  %s8 = inlined_call_operand.vmem [shape: f32[1,16], index: 8, kind: input, shape index: {}]
  %s9 = inlined_call_operand.vmem [shape: bf16[16,16], index: 9, kind: input, shape index: {}]
  %s10 = inlined_call_operand.vmem [shape: f32[1,16], index: 10, kind: input, shape index: {}]
  %s11 = inlined_call_operand.vmem [shape: f32[2,2,256,16], index: 11, kind: output, shape index: {}]
  %s12 = sld [smem:[#allocation0]]
  $region93: #{tpu_custom_call.1} parent=0
    _
  %s14 = ssub.s32 1, %s12
  %s15 = scalar_select 0, %s14, %s12
  $region1: #{tpu_custom_call.1} parent=0
    #allocation3 [shape = 'u8[65536]{0}', space=vmem, size = 0x10000, scoped, tag = 'input window, operand 0']
    #allocation4 [shape = 's32[2]{0}', space=sflag, size = 0x8, scoped, tag = 'scoped memory for tpu_custom_call.1']
    #allocation5 [shape = 'u8[8192]{0}', space=vmem, size = 0x2000, scoped, tag = 'input window, operand 1']
    #allocation6 [shape = 's32[2]{0}', space=sflag, size = 0x8, scoped, tag = 'scoped memory for tpu_custom_call.1']
    #allocation7 [shape = 'u8[8192]{0}', space=vmem, size = 0x2000, scoped, tag = 'input window, operand 2']
    #allocation8 [shape = 'u8[12288]{0}', space=vmem, size = 0x3000, scoped, tag = 'input window, operand 3, single buffered']
    #allocation9 [shape = 's32[1]{0}', space=sflag, size = 0x4, scoped, tag = 'scoped memory for tpu_custom_call.1']
    %16 = vsyncpa [#allocation4], 0
    %s17 = scalar_lea.sflag [#allocation4], 1
    %18 = vsyncpa %s17, 0
    %19 = vsyncpa [#allocation6], 0
    %s20 = scalar_lea.sflag [#allocation6], 1
    %21 = vsyncpa %s20, 0
    %22 = vsyncpa [#allocation9], 0
    loop: start=0, step=1, limit=6
    $region2: #{tpu_custom_call.1} parent=1 // loop_pre_header
      _
    $region3: #{tpu_custom_call.1} parent=1 // loop_header
      %s24 = sphi 0, %s28
      %p25 = scmp.ge.s32.totalorder %s24, 6
      %s31 = sphi 0, %s43
      %s32 = sphi 0, %s39
      %s33 = sphi 0, %s31
      %s34 = sphi 0, %s32
      %s35 = sphi 0, %s33
      %s36 = sphi 0, %s34
      %s48 = sphi 0, %s50
      %s51 = sphi 0, %s48
      %s52 = sphi 0, %s51
      %s68 = sphi 0, %s52
      %s84 = sphi 0, %s86
      %s87 = sphi 0, %s84
      %s88 = sphi 0, %s87
      %s104 = sphi 0, %s88
      %s120 = sphi 0, %s122
      %s123 = sphi 0, %s120
      %s124 = sphi 0, %s123
      %s140 = sphi 0, %s124
      %s144 = sphi 0, %s144
      %s146 = sphi 0, %s144
      %s147 = sphi 0, %s146
      %s161 = sphi 0, %s147
      %s165 = sphi 0, %s165
      %s167 = sphi 0, %s165
      %s168 = sphi 0, %s167
      %s182 = sphi 0, %s168
      %s186 = sphi 0, %s186
      %s188 = sphi 0, %s186
      %s189 = sphi 0, %s188
      %s203 = sphi 0, %s189
      %s207 = sphi 0, %s207
      %s209 = sphi 0, %s207
      %s210 = sphi 0, %s209
      %s224 = sphi 0, %s210
      %s228 = sphi 0, %s228
      %s230 = sphi 0, %s228
      %s231 = sphi 0, %s230
      %s245 = sphi 0, %s231
      %s249 = sphi 0, %s249
      %s251 = sphi 0, %s249
      %s252 = sphi 0, %s251
      %s266 = sphi 0, %s252
      %s270 = sphi 0, %s270
      %s272 = sphi 0, %s270
      %s273 = sphi 0, %s272
      %s287 = sphi 0, %s273
      %s291 = sphi 0, %s291
      %s293 = sphi 0, %s291
      %s294 = sphi 0, %s293
      %s308 = sphi 0, %s294
      %s316 = sphi 0, %s318
      %s319 = sphi 0, %s316
      %s320 = sphi 0, %s319
      %s336 = sphi 0, %s320
    $region4: #{tpu_custom_call.1} parent=1 // loop_header_branch
      %27 = sbr.rel (%p25) target = $region8
    $region5: #{tpu_custom_call.1} parent=1 // loop_body
      %s29 = ssub.s32 %s24, 1
      %s30 = ssub.s32 %s24, 2
      %s37 = sadd.s32 1, %s32
      %p38 = scmp.ge.s32.totalorder %s37, 2
      %s39 = scalar_select %p38, 0, %s37
      %s40 = sadd.s32 1, %s31
      %s41 = scalar_select %p38, %s40, %s31
      %p42 = scmp.ge.s32.totalorder %s41, 2
      %s43 = scalar_select %p42, 0, %s41
      %s44 = ssub.s32 %s31, %s43
      %s45 = ssub.s32 %s32, %s39
      %s46 = sor.u32 %s44, %s45
      %p47 = scmp.eq.s32.totalorder %s46, 0
      %s49 = sadd.s32 %s48, 1
      %s50 = scalar_select %p47, %s48, %s49
      %p53 = pneg %p47
      %p54 = scmp.eq.s32.totalorder %s24, 3
      %p55 = por %p53, %p54
      %p56 = scmp.ne.s32.totalorder %s48, %s51
      %p57 = scmp.eq.s32.totalorder %s24, 0
      %p58 = por %p56, %p57
      %p59 = scmp.ne.s32.totalorder %s48, %s51
      %p60 = scmp.eq.s32.totalorder %s29, 3
      %p61 = por %p59, %p60
      %p62 = scmp.ne.s32.totalorder %s51, %s52
      %p63 = scmp.eq.s32.totalorder %s29, 0
      %p64 = por %p62, %p63
      %p65 = scmp.ne.s32.totalorder %s51, %s52
      %p66 = scmp.eq.s32.totalorder %s30, 3
      %p67 = por %p65, %p66
      %p69 = scmp.ne.s32.totalorder %s52, %s68
      %p70 = scmp.eq.s32.totalorder %s30, 0
      %p71 = por %p69, %p70
      %s72 = smul.u32 %s32, 8
      %s73 = ssub.s32 %s72, 1
      %p74 = scmp.gt.s32.totalorder %s73, 0
      %s75 = scalar_select %p74, %s73, 0
      %s76 = smul.u32 %s39, 8
      %s77 = ssub.s32 %s76, 1
      %p78 = scmp.gt.s32.totalorder %s77, 0
      %s79 = scalar_select %p78, %s77, 0
      %s80 = ssub.s32 %s31, %s43
      %s81 = ssub.s32 %s75, %s79
      %s82 = sor.u32 %s80, %s81
      %p83 = scmp.eq.s32.totalorder %s82, 0
      %s85 = sadd.s32 %s84, 1
      %s86 = scalar_select %p83, %s84, %s85
      %p89 = pneg %p83
      %p90 = scmp.eq.s32.totalorder %s24, 3
      %p91 = por %p89, %p90
      %p92 = scmp.ne.s32.totalorder %s84, %s87
      %p93 = scmp.eq.s32.totalorder %s24, 0
      %p94 = por %p92, %p93
      %p95 = scmp.ne.s32.totalorder %s84, %s87
      %p96 = scmp.eq.s32.totalorder %s29, 3
      %p97 = por %p95, %p96
      %p98 = scmp.ne.s32.totalorder %s87, %s88
      %p99 = scmp.eq.s32.totalorder %s29, 0
      %p100 = por %p98, %p99
      %p101 = scmp.ne.s32.totalorder %s87, %s88
      %p102 = scmp.eq.s32.totalorder %s30, 3
      %p103 = por %p101, %p102
      %p105 = scmp.ne.s32.totalorder %s88, %s104
      %p106 = scmp.eq.s32.totalorder %s30, 0
      %p107 = por %p105, %p106
      %s108 = sadd.s32 %s32, 1
      %s109 = smul.u32 %s108, 8
      %p110 = scmp.lt.s32.totalorder %s109, 15
      %s111 = scalar_select %p110, %s109, 15
      %s112 = sadd.s32 %s39, 1
      %s113 = smul.u32 %s112, 8
      %p114 = scmp.lt.s32.totalorder %s113, 15
      %s115 = scalar_select %p114, %s113, 15
      %s116 = ssub.s32 %s31, %s43
      %s117 = ssub.s32 %s111, %s115
      %s118 = sor.u32 %s116, %s117
      %p119 = scmp.eq.s32.totalorder %s118, 0
      %s121 = sadd.s32 %s120, 1
      %s122 = scalar_select %p119, %s120, %s121
      %p125 = pneg %p119
      %p126 = scmp.eq.s32.totalorder %s24, 3
      %p127 = por %p125, %p126
      %p128 = scmp.ne.s32.totalorder %s120, %s123
      %p129 = scmp.eq.s32.totalorder %s24, 0
      %p130 = por %p128, %p129
      %p131 = scmp.ne.s32.totalorder %s120, %s123
      %p132 = scmp.eq.s32.totalorder %s29, 3
      %p133 = por %p131, %p132
      %p134 = scmp.ne.s32.totalorder %s123, %s124
      %p135 = scmp.eq.s32.totalorder %s29, 0
      %p136 = por %p134, %p135
      %p137 = scmp.ne.s32.totalorder %s123, %s124
      %p138 = scmp.eq.s32.totalorder %s30, 3
      %p139 = por %p137, %p138
      %p141 = scmp.ne.s32.totalorder %s124, %s140
      %p142 = scmp.eq.s32.totalorder %s30, 0
      %p143 = por %p141, %p142
      %s145 = sadd.s32 %s144, 1
      %p148 = scmp.eq.s32.totalorder %s24, 3
      %p149 = scmp.ne.s32.totalorder %s144, %s146
      %p150 = scmp.eq.s32.totalorder %s24, 0
      %p151 = por %p149, %p150
      %p152 = scmp.ne.s32.totalorder %s144, %s146
      %p153 = scmp.eq.s32.totalorder %s29, 3
      %p154 = por %p152, %p153
      %p155 = scmp.ne.s32.totalorder %s146, %s147
      %p156 = scmp.eq.s32.totalorder %s29, 0
      %p157 = por %p155, %p156
      %p158 = scmp.ne.s32.totalorder %s146, %s147
      %p159 = scmp.eq.s32.totalorder %s30, 3
      %p160 = por %p158, %p159
      %p162 = scmp.ne.s32.totalorder %s147, %s161
      %p163 = scmp.eq.s32.totalorder %s30, 0
      %p164 = por %p162, %p163
      %s166 = sadd.s32 %s165, 1
      %p169 = scmp.eq.s32.totalorder %s24, 3
      %p170 = scmp.ne.s32.totalorder %s165, %s167
      %p171 = scmp.eq.s32.totalorder %s24, 0
      %p172 = por %p170, %p171
      %p173 = scmp.ne.s32.totalorder %s165, %s167
      %p174 = scmp.eq.s32.totalorder %s29, 3
      %p175 = por %p173, %p174
      %p176 = scmp.ne.s32.totalorder %s167, %s168
      %p177 = scmp.eq.s32.totalorder %s29, 0
      %p178 = por %p176, %p177
      %p179 = scmp.ne.s32.totalorder %s167, %s168
      %p180 = scmp.eq.s32.totalorder %s30, 3
      %p181 = por %p179, %p180
      %p183 = scmp.ne.s32.totalorder %s168, %s182
      %p184 = scmp.eq.s32.totalorder %s30, 0
      %p185 = por %p183, %p184
      %s187 = sadd.s32 %s186, 1
      %p190 = scmp.eq.s32.totalorder %s24, 3
      %p191 = scmp.ne.s32.totalorder %s186, %s188
      %p192 = scmp.eq.s32.totalorder %s24, 0
      %p193 = por %p191, %p192
      %p194 = scmp.ne.s32.totalorder %s186, %s188
      %p195 = scmp.eq.s32.totalorder %s29, 3
      %p196 = por %p194, %p195
      %p197 = scmp.ne.s32.totalorder %s188, %s189
      %p198 = scmp.eq.s32.totalorder %s29, 0
      %p199 = por %p197, %p198
      %p200 = scmp.ne.s32.totalorder %s188, %s189
      %p201 = scmp.eq.s32.totalorder %s30, 3
      %p202 = por %p200, %p201
      %p204 = scmp.ne.s32.totalorder %s189, %s203
      %p205 = scmp.eq.s32.totalorder %s30, 0
      %p206 = por %p204, %p205
      %s208 = sadd.s32 %s207, 1
      %p211 = scmp.eq.s32.totalorder %s24, 3
      %p212 = scmp.ne.s32.totalorder %s207, %s209
      %p213 = scmp.eq.s32.totalorder %s24, 0
      %p214 = por %p212, %p213
      %p215 = scmp.ne.s32.totalorder %s207, %s209
      %p216 = scmp.eq.s32.totalorder %s29, 3
      %p217 = por %p215, %p216
      %p218 = scmp.ne.s32.totalorder %s209, %s210
      %p219 = scmp.eq.s32.totalorder %s29, 0
      %p220 = por %p218, %p219
      %p221 = scmp.ne.s32.totalorder %s209, %s210
      %p222 = scmp.eq.s32.totalorder %s30, 3
      %p223 = por %p221, %p222
      %p225 = scmp.ne.s32.totalorder %s210, %s224
      %p226 = scmp.eq.s32.totalorder %s30, 0
      %p227 = por %p225, %p226
      %s229 = sadd.s32 %s228, 1
      %p232 = scmp.eq.s32.totalorder %s24, 3
      %p233 = scmp.ne.s32.totalorder %s228, %s230
      %p234 = scmp.eq.s32.totalorder %s24, 0
      %p235 = por %p233, %p234
      %p236 = scmp.ne.s32.totalorder %s228, %s230
      %p237 = scmp.eq.s32.totalorder %s29, 3
      %p238 = por %p236, %p237
      %p239 = scmp.ne.s32.totalorder %s230, %s231
      %p240 = scmp.eq.s32.totalorder %s29, 0
      %p241 = por %p239, %p240
      %p242 = scmp.ne.s32.totalorder %s230, %s231
      %p243 = scmp.eq.s32.totalorder %s30, 3
      %p244 = por %p242, %p243
      %p246 = scmp.ne.s32.totalorder %s231, %s245
      %p247 = scmp.eq.s32.totalorder %s30, 0
      %p248 = por %p246, %p247
      %s250 = sadd.s32 %s249, 1
      %p253 = scmp.eq.s32.totalorder %s24, 3
      %p254 = scmp.ne.s32.totalorder %s249, %s251
      %p255 = scmp.eq.s32.totalorder %s24, 0
      %p256 = por %p254, %p255
      %p257 = scmp.ne.s32.totalorder %s249, %s251
      %p258 = scmp.eq.s32.totalorder %s29, 3
      %p259 = por %p257, %p258
      %p260 = scmp.ne.s32.totalorder %s251, %s252
      %p261 = scmp.eq.s32.totalorder %s29, 0
      %p262 = por %p260, %p261
      %p263 = scmp.ne.s32.totalorder %s251, %s252
      %p264 = scmp.eq.s32.totalorder %s30, 3
      %p265 = por %p263, %p264
      %p267 = scmp.ne.s32.totalorder %s252, %s266
      %p268 = scmp.eq.s32.totalorder %s30, 0
      %p269 = por %p267, %p268
      %s271 = sadd.s32 %s270, 1
      %p274 = scmp.eq.s32.totalorder %s24, 3
      %p275 = scmp.ne.s32.totalorder %s270, %s272
      %p276 = scmp.eq.s32.totalorder %s24, 0
      %p277 = por %p275, %p276
      %p278 = scmp.ne.s32.totalorder %s270, %s272
      %p279 = scmp.eq.s32.totalorder %s29, 3
      %p280 = por %p278, %p279
      %p281 = scmp.ne.s32.totalorder %s272, %s273
      %p282 = scmp.eq.s32.totalorder %s29, 0
      %p283 = por %p281, %p282
      %p284 = scmp.ne.s32.totalorder %s272, %s273
      %p285 = scmp.eq.s32.totalorder %s30, 3
      %p286 = por %p284, %p285
      %p288 = scmp.ne.s32.totalorder %s273, %s287
      %p289 = scmp.eq.s32.totalorder %s30, 0
      %p290 = por %p288, %p289
      %s292 = sadd.s32 %s291, 1
      %p295 = scmp.eq.s32.totalorder %s24, 3
      %p296 = scmp.ne.s32.totalorder %s291, %s293
      %p297 = scmp.eq.s32.totalorder %s24, 0
      %p298 = por %p296, %p297
      %p299 = scmp.ne.s32.totalorder %s291, %s293
      %p300 = scmp.eq.s32.totalorder %s29, 3
      %p301 = por %p299, %p300
      %p302 = scmp.ne.s32.totalorder %s293, %s294
      %p303 = scmp.eq.s32.totalorder %s29, 0
      %p304 = por %p302, %p303
      %p305 = scmp.ne.s32.totalorder %s293, %s294
      %p306 = scmp.eq.s32.totalorder %s30, 3
      %p307 = por %p305, %p306
      %p309 = scmp.ne.s32.totalorder %s294, %s308
      %p310 = scmp.eq.s32.totalorder %s30, 0
      %p311 = por %p309, %p310
      %s312 = ssub.s32 %s31, %s43
      %s313 = ssub.s32 %s32, %s39
      %s314 = sor.u32 %s312, %s313
      %p315 = scmp.eq.s32.totalorder %s314, 0
      %s317 = sadd.s32 %s316, 1
      %s318 = scalar_select %p315, %s316, %s317
      %p321 = pneg %p315
      %p322 = scmp.eq.s32.totalorder %s24, 3
      %p323 = por %p321, %p322
      %p324 = scmp.ne.s32.totalorder %s316, %s319
      %p325 = scmp.eq.s32.totalorder %s24, 0
      %p326 = por %p324, %p325
      %p327 = scmp.ne.s32.totalorder %s316, %s319
      %p328 = scmp.eq.s32.totalorder %s29, 3
      %p329 = por %p327, %p328
      %p330 = scmp.ne.s32.totalorder %s319, %s320
      %p331 = scmp.eq.s32.totalorder %s29, 0
      %p332 = por %p330, %p331
      %p333 = scmp.ne.s32.totalorder %s319, %s320
      %p334 = scmp.eq.s32.totalorder %s30, 3
      %p335 = por %p333, %p334
      %p337 = scmp.ne.s32.totalorder %s320, %s336
      %p338 = scmp.eq.s32.totalorder %s30, 0
      %p339 = por %p337, %p338
      %p340 = scmp.le.s32.totalorder 1, %s24
      %p341 = scmp.lt.s32.totalorder %s24, 5
      %p342 = pnand %p340, %p341
      %p343 = pneg %p342
      // Predicated region
      $region9: #{tpu_custom_call.1} parent=5 // pred_check
        _
      $region10: #{tpu_custom_call.1} parent=5 // pred_check_branch
        %345 = sbr.rel (%p342) target = $region12
      $region11: #{tpu_custom_call.1} parent=5 // pred_region
        %s346 = ssub.s32 %s24, 1
        // Predicated region
        $region13: #{tpu_custom_call.1} parent=11 // pred_check
          %p347 = pneg %p157
        $region14: #{tpu_custom_call.1} parent=11 // pred_check_branch
          %349 = sbr.rel (%p347) target = $region16
        $region15: #{tpu_custom_call.1} parent=11 // pred_region
          %s351 = ssub.s32 384, 384
          %352 = vsyncadd [#allocation9], %s351
          %s353 = sshll.u32 [#allocation8], 4
          %s354 = int_to_ptr.vmem [resolvable:$true] %s353
          %359 = dma.hbm_to_vmem [thread:$0]  %s3, 384, %s354, [#allocation9], 64, 64, 4
        $region16: #{tpu_custom_call.1} parent=11 // pred_fallthru
          _
        // Predicated region
        $region17: #{tpu_custom_call.1} parent=11 // pred_check
          %p360 = pneg %p178
        $region18: #{tpu_custom_call.1} parent=11 // pred_check_branch
          %362 = sbr.rel (%p360) target = $region20
        $region19: #{tpu_custom_call.1} parent=11 // pred_region
          _
        $region20: #{tpu_custom_call.1} parent=11 // pred_fallthru
          _
        // Predicated region
        $region21: #{tpu_custom_call.1} parent=11 // pred_check
          %p363 = pneg %p199
        $region22: #{tpu_custom_call.1} parent=11 // pred_check_branch
          %365 = sbr.rel (%p363) target = $region24
        $region23: #{tpu_custom_call.1} parent=11 // pred_region
          _
        $region24: #{tpu_custom_call.1} parent=11 // pred_fallthru
          _
        // Predicated region
        $region25: #{tpu_custom_call.1} parent=11 // pred_check
          %p366 = pneg %p220
        $region26: #{tpu_custom_call.1} parent=11 // pred_check_branch
          %368 = sbr.rel (%p366) target = $region28
        $region27: #{tpu_custom_call.1} parent=11 // pred_region
          _
        $region28: #{tpu_custom_call.1} parent=11 // pred_fallthru
          _
        // Predicated region
        $region29: #{tpu_custom_call.1} parent=11 // pred_check
          %p369 = pneg %p241
        $region30: #{tpu_custom_call.1} parent=11 // pred_check_branch
          %371 = sbr.rel (%p369) target = $region32
        $region31: #{tpu_custom_call.1} parent=11 // pred_region
          _
        $region32: #{tpu_custom_call.1} parent=11 // pred_fallthru
          _
        // Predicated region
        $region33: #{tpu_custom_call.1} parent=11 // pred_check
          %p372 = pneg %p262
        $region34: #{tpu_custom_call.1} parent=11 // pred_check_branch
          %374 = sbr.rel (%p372) target = $region36
        $region35: #{tpu_custom_call.1} parent=11 // pred_region
          _
        $region36: #{tpu_custom_call.1} parent=11 // pred_fallthru
          _
        // Predicated region
        $region37: #{tpu_custom_call.1} parent=11 // pred_check
          %p375 = pneg %p283
        $region38: #{tpu_custom_call.1} parent=11 // pred_check_branch
          %377 = sbr.rel (%p375) target = $region40
        $region39: #{tpu_custom_call.1} parent=11 // pred_region
          _
        $region40: #{tpu_custom_call.1} parent=11 // pred_fallthru
          _
        // Predicated region
        $region41: #{tpu_custom_call.1} parent=11 // pred_check
          %p378 = pneg %p304
        $region42: #{tpu_custom_call.1} parent=11 // pred_check_branch
          %380 = sbr.rel (%p378) target = $region44
        $region43: #{tpu_custom_call.1} parent=11 // pred_region
          _
        $region44: #{tpu_custom_call.1} parent=11 // pred_fallthru
          _
      $region12: #{tpu_custom_call.1} parent=5 // pred_fallthru
        _
      %p381 = scmp.lt.s32.totalorder %s24, 4
      // Predicated region
      $region45: #{tpu_custom_call.1} parent=5 // pred_check
        %p382 = pneg %p381
      $region46: #{tpu_custom_call.1} parent=5 // pred_check_branch
        %384 = sbr.rel (%p382) target = $region48
      $region47: #{tpu_custom_call.1} parent=5 // pred_region
        // Predicated region
        $region49: #{tpu_custom_call.1} parent=47 // pred_check
          %p385 = pneg %p58
        $region50: #{tpu_custom_call.1} parent=47 // pred_check_branch
          %387 = sbr.rel (%p385) target = $region52
        $region51: #{tpu_custom_call.1} parent=47 // pred_region
          %s388 = sand.u32 %s48, 1
          %s389 = scalar_lea.sflag [#allocation4], %s388
          %s390 = sand.u32 %s48, 1
          %s391 = smul.addr %s390, 64
          %s392 = scalar_lea.vmem [#allocation3], %s391
          %s393 = smul.u32 8, %s32
          %s395 = ssub.s32 1024, 1024
          %396 = vsyncadd %s389, %s395
          %s397 = smul.addr %s393, 2
          %s398 = smul.addr %s31, 32
          %s399 = sadd.s32 %s397, %s398
          %s400 = smul.addr %s399, 64
          %s401 = scalar_lea.hbm %s0, %s400
          %s402 = sshll.u32 %s392, 4
          %s403 = int_to_ptr.vmem [resolvable:$true] %s402
          %408 = dma.hbm_to_vmem [thread:$0]  %s401, 1024, %s403, %s389, 64, 64, 4
        $region52: #{tpu_custom_call.1} parent=47 // pred_fallthru
          _
        // Predicated region
        $region53: #{tpu_custom_call.1} parent=47 // pred_check
          %p409 = pneg %p94
        $region54: #{tpu_custom_call.1} parent=47 // pred_check_branch
          %411 = sbr.rel (%p409) target = $region56
        $region55: #{tpu_custom_call.1} parent=47 // pred_region
          %s412 = sand.u32 %s24, 1
          %s413 = scalar_lea.sflag [#allocation6], %s412
          %s414 = sand.u32 %s84, 1
          %s415 = smul.addr %s414, 8
          %s416 = scalar_lea.vmem [#allocation5], %s415
          %s417 = smul.u32 %s32, 8
          %s418 = ssub.s32 %s417, 1
          %p419 = scmp.gt.s32.totalorder %s418, 0
          %s420 = scalar_select %p419, %s418, 0
          %s422 = ssub.s32 128, 128
          %423 = vsyncadd %s413, %s422
          %s424 = smul.addr %s420, 2
          %s425 = smul.addr %s31, 32
          %s426 = sadd.s32 %s424, %s425
          %s427 = smul.addr %s426, 64
          %s428 = scalar_lea.hbm %s1, %s427
          %s429 = sshll.u32 %s416, 4
          %s430 = int_to_ptr.vmem [resolvable:$true] %s429
          %435 = dma.hbm_to_vmem [thread:$0]  %s428, 128, %s430, %s413, 64, 64, 4
        $region56: #{tpu_custom_call.1} parent=47 // pred_fallthru
          _
        // Predicated region
        $region57: #{tpu_custom_call.1} parent=47 // pred_check
          %p436 = pneg %p130
        $region58: #{tpu_custom_call.1} parent=47 // pred_check_branch
          %438 = sbr.rel (%p436) target = $region60
        $region59: #{tpu_custom_call.1} parent=47 // pred_region
          %s439 = sand.u32 %s24, 1
          %s440 = scalar_lea.sflag [#allocation6], %s439
          %s441 = sand.u32 %s120, 1
          %s442 = smul.addr %s441, 8
          %s443 = scalar_lea.vmem [#allocation7], %s442
          %s444 = sadd.s32 %s32, 1
          %s445 = smul.u32 %s444, 8
          %p446 = scmp.lt.s32.totalorder %s445, 15
          %s447 = scalar_select %p446, %s445, 15
          %s449 = ssub.s32 128, 128
          %450 = vsyncadd %s440, %s449
          %s451 = smul.addr %s447, 2
          %s452 = smul.addr %s31, 32
          %s453 = sadd.s32 %s451, %s452
          %s454 = smul.addr %s453, 64
          %s455 = scalar_lea.hbm %s2, %s454
          %s456 = sshll.u32 %s443, 4
          %s457 = int_to_ptr.vmem [resolvable:$true] %s456
          %462 = dma.hbm_to_vmem [thread:$0]  %s455, 128, %s457, %s440, 64, 64, 4
        $region60: #{tpu_custom_call.1} parent=47 // pred_fallthru
          _
      $region48: #{tpu_custom_call.1} parent=5 // pred_fallthru
        _
      %p463 = scmp.le.s32.totalorder 1, %s24
      %p464 = scmp.lt.s32.totalorder %s24, 5
      %p465 = pnand %p463, %p464
      %p466 = pneg %p465
      // Predicated region
      $region61: #{tpu_custom_call.1} parent=5 // pred_check
        _
      $region62: #{tpu_custom_call.1} parent=5 // pred_check_branch
        %468 = sbr.rel (%p465) target = $region64
      $region63: #{tpu_custom_call.1} parent=5 // pred_region
        %s469 = ssub.s32 %s24, 1
        %s470 = sand.u32 %s51, 1
        %s471 = scalar_lea.sflag [#allocation4], %s470
        %s472 = sand.u32 %s51, 1
        %s473 = smul.addr %s472, 64
        %s474 = scalar_lea.vmem [#allocation3], %s473
        // Predicated region
        $region65: #{tpu_custom_call.1} parent=63 // pred_check
          %p475 = pneg %p64
        $region66: #{tpu_custom_call.1} parent=63 // pred_check_branch
          %477 = sbr.rel (%p475) target = $region68
        $region67: #{tpu_custom_call.1} parent=63 // pred_region
          %478 = dma.done %s471, 1024
        $region68: #{tpu_custom_call.1} parent=63 // pred_fallthru
          _
        %s479 = sand.u32 %s29, 1
        %s480 = scalar_lea.sflag [#allocation6], %s479
        %s481 = sand.u32 %s87, 1
        %s482 = smul.addr %s481, 8
        %s483 = scalar_lea.vmem [#allocation5], %s482
        // Predicated region
        $region69: #{tpu_custom_call.1} parent=63 // pred_check
          %p484 = pneg %p100
        $region70: #{tpu_custom_call.1} parent=63 // pred_check_branch
          %486 = sbr.rel (%p484) target = $region72
        $region71: #{tpu_custom_call.1} parent=63 // pred_region
          %487 = dma.done %s480, 128
        $region72: #{tpu_custom_call.1} parent=63 // pred_fallthru
          _
        %s488 = sand.u32 %s29, 1
        %s489 = scalar_lea.sflag [#allocation6], %s488
        %s490 = sand.u32 %s123, 1
        %s491 = smul.addr %s490, 8
        %s492 = scalar_lea.vmem [#allocation7], %s491
        // Predicated region
        $region73: #{tpu_custom_call.1} parent=63 // pred_check
          %p493 = pneg %p136
        $region74: #{tpu_custom_call.1} parent=63 // pred_check_branch
          %495 = sbr.rel (%p493) target = $region76
        $region75: #{tpu_custom_call.1} parent=63 // pred_region
          %496 = dma.done %s489, 128
        $region76: #{tpu_custom_call.1} parent=63 // pred_fallthru
          _
        // Predicated region
        $region77: #{tpu_custom_call.1} parent=63 // pred_check
          %p497 = pneg %p157
        $region78: #{tpu_custom_call.1} parent=63 // pred_check_branch
          %499 = sbr.rel (%p497) target = $region80
        $region79: #{tpu_custom_call.1} parent=63 // pred_region
          %500 = dma.done [#allocation9], 384
        $region80: #{tpu_custom_call.1} parent=63 // pred_fallthru
          _
        %s501 = sand.u32 %s51, 1
        %s502 = scalar_lea.sflag [#allocation4], %s501
        %s503 = sand.u32 %s51, 1
        %s504 = smul.addr %s503, 64
        %s505 = scalar_lea.vmem [#allocation3], %s504
        %p506 = pneg %p64
        %p507 = pneg %p61
        %s508 = sand.u32 %s29, 1
        %s509 = scalar_lea.sflag [#allocation6], %s508
        %s510 = sand.u32 %s87, 1
        %s511 = smul.addr %s510, 8
        %s512 = scalar_lea.vmem [#allocation5], %s511
        %p513 = pneg %p100
        %p514 = pneg %p97
        %s515 = sand.u32 %s29, 1
        %s516 = scalar_lea.sflag [#allocation6], %s515
        %s517 = sand.u32 %s123, 1
        %s518 = smul.addr %s517, 8
        %s519 = scalar_lea.vmem [#allocation7], %s518
        %p520 = pneg %p136
        %p521 = pneg %p133
        %p522 = pneg %p157
        %p523 = pneg %p154
        %p524 = pneg %p178
        %p525 = pneg %p175
        %p526 = pneg %p199
        %p527 = pneg %p196
        %p528 = pneg %p220
        %p529 = pneg %p217
        %p530 = pneg %p241
        %p531 = pneg %p238
        %p532 = pneg %p262
        %p533 = pneg %p259
        %p534 = pneg %p283
        %p535 = pneg %p280
        %p536 = pneg %p304
        %p537 = pneg %p301
        %p538 = pneg %p332
        %p539 = pneg %p329
        %p540 = scmp.lt.s32.totalorder %s33, 1
        %s541 = scalar_select %p540, %s33, 1
        %p542 = scmp.lt.s32.totalorder %s34, 1
        %s543 = scalar_select %p542, %s34, 1
        %s544 = smul.addr %s543, 32
        %s545 = smul.addr %s541, 64
        %s546 = sadd.s32 %s544, %s545
        %s547 = smul.addr %s546, 8
        %s548 = scalar_lea.vmem %s11, %s547
        %s549 = smul.u32 8, %s34
        %s550 = smul.u32 %s34, 8
        %s551 = ssub.s32 %s550, 1
        %p552 = scmp.gt.s32.totalorder %s551, 0
        %s553 = scalar_select %p552, %s551, 0
        %s554 = sadd.s32 %s34, 1
        %s555 = smul.u32 %s554, 8
        %p556 = scmp.lt.s32.totalorder %s555, 15
        %s557 = scalar_select %p556, %s555, 15
        %p558 = scmp.lt.s32.totalorder %s33, 1
        %s559 = scalar_select %p558, %s33, 1
        %p560 = scmp.lt.s32.totalorder %s34, 1
        %s561 = scalar_select %p560, %s34, 1
        %s562 = smul.addr %s561, 32
        %s563 = smul.addr %s559, 64
        %s564 = sadd.s32 %s562, %s563
        %s565 = smul.addr %s564, 8
        %s566 = scalar_lea.vmem %s11, %s565
        %vm568 = vcmask 125952
        %569 = vst.msk [vmem:[#allocation2 + $0x8] sm:$0xf] %vm568, 0
        %570 = vst.msk [vmem:[#allocation2 + $0xc] sm:$0xf] %vm568, 0
        %571 = vst.msk [vmem:[#allocation2 + $0x18] sm:$0xf] %vm568, 0
        %572 = vst.msk [vmem:[#allocation2 + $0x1c] sm:$0xf] %vm568, 0
        %573 = vst.msk [vmem:[#allocation2 + $0x28] sm:$0xf] %vm568, 0
        %574 = vst.msk [vmem:[#allocation2 + $0x2c] sm:$0xf] %vm568, 0
        %575 = vst.msk [vmem:[#allocation2 + $0x38] sm:$0xf] %vm568, 0
        %576 = vst.msk [vmem:[#allocation2 + $0x3c] sm:$0xf] %vm568, 0
        %577 = vst.msk [vmem:[#allocation2 + $0x48] sm:$0xf] %vm568, 0
        %578 = vst.msk [vmem:[#allocation2 + $0x4c] sm:$0xf] %vm568, 0
        %579 = vst.msk [vmem:[#allocation2 + $0x58] sm:$0xf] %vm568, 0
        %580 = vst.msk [vmem:[#allocation2 + $0x5c] sm:$0xf] %vm568, 0
        %581 = vst.msk [vmem:[#allocation2 + $0x68] sm:$0xf] %vm568, 0
        %582 = vst.msk [vmem:[#allocation2 + $0x6c] sm:$0xf] %vm568, 0
        %583 = vst.msk [vmem:[#allocation2 + $0x78] sm:$0xf] %vm568, 0
        %584 = vst.msk [vmem:[#allocation2 + $0x7c] sm:$0xf] %vm568, 0
        %585 = vst.msk [vmem:[#allocation2 + $0x88] sm:$0xf] %vm568, 0
        %586 = vst.msk [vmem:[#allocation2 + $0x8c] sm:$0xf] %vm568, 0
        %587 = vst.msk [vmem:[#allocation2 + $0x98] sm:$0xf] %vm568, 0
        %588 = vst.msk [vmem:[#allocation2 + $0x9c] sm:$0xf] %vm568, 0
        %v589 = vld [vmem:[%s474] sm:$0xf]
        %v590 = vld [vmem:[%s474 + $0x4] sm:$0xf]
        %v591 = vld [vmem:[%s474 + $0x8] sm:$0xf]
        %v592 = vld [vmem:[%s474 + $0xc] sm:$0xf]
        %v593 = vld [vmem:[%s474 + $0x10] sm:$0xf]
        %v594 = vld [vmem:[%s474 + $0x14] sm:$0xf]
        %v595 = vld [vmem:[%s474 + $0x18] sm:$0xf]
        %v596 = vld [vmem:[%s474 + $0x1c] sm:$0xf]
        %v597 = vld [vmem:[%s474 + $0x20] sm:$0xf]
        %v598 = vld [vmem:[%s474 + $0x24] sm:$0xf]
        %v599 = vld [vmem:[%s474 + $0x28] sm:$0xf]
        %v600 = vld [vmem:[%s474 + $0x2c] sm:$0xf]
        %v601 = vld [vmem:[%s474 + $0x30] sm:$0xf]
        %v602 = vld [vmem:[%s474 + $0x34] sm:$0xf]
        %v603 = vld [vmem:[%s474 + $0x38] sm:$0xf]
        %v604 = vld [vmem:[%s474 + $0x3c] sm:$0xf]
        %s605 = scalar_lea.vmem [#allocation2], 16
        %606 = vst.msk [vmem:[%s605] sm:$0xf] %vm568, %v589
        %607 = vst.msk [vmem:[%s605 + $0x4] sm:$0xf] %vm568, %v590
        %608 = vst.msk [vmem:[%s605 + $0x10] sm:$0xf] %vm568, %v591
        %609 = vst.msk [vmem:[%s605 + $0x14] sm:$0xf] %vm568, %v592
        %610 = vst.msk [vmem:[%s605 + $0x20] sm:$0xf] %vm568, %v593
        %611 = vst.msk [vmem:[%s605 + $0x24] sm:$0xf] %vm568, %v594
        %612 = vst.msk [vmem:[%s605 + $0x30] sm:$0xf] %vm568, %v595
        %613 = vst.msk [vmem:[%s605 + $0x34] sm:$0xf] %vm568, %v596
        %614 = vst.msk [vmem:[%s605 + $0x40] sm:$0xf] %vm568, %v597
        %615 = vst.msk [vmem:[%s605 + $0x44] sm:$0xf] %vm568, %v598
        %616 = vst.msk [vmem:[%s605 + $0x50] sm:$0xf] %vm568, %v599
        %617 = vst.msk [vmem:[%s605 + $0x54] sm:$0xf] %vm568, %v600
        %618 = vst.msk [vmem:[%s605 + $0x60] sm:$0xf] %vm568, %v601
        %619 = vst.msk [vmem:[%s605 + $0x64] sm:$0xf] %vm568, %v602
        %620 = vst.msk [vmem:[%s605 + $0x70] sm:$0xf] %vm568, %v603
        %621 = vst.msk [vmem:[%s605 + $0x74] sm:$0xf] %vm568, %v604
        %v622 = vld [vmem:[%s483] sm:$0xf]
        %v623 = vld [vmem:[%s483 + $0x4] sm:$0xf]
        %v624 = vld [vmem:[%s492] sm:$0xf]
        %v625 = vld [vmem:[%s492 + $0x4] sm:$0xf]
        %p626 = scmp.gt.s32.totalorder %s34, 0
        %s627 = scalar_select %p626, 1, 0
        %v628 = vstv %s627
        %vm629 = vcmp.eq.s32.totalorder %v628, 1
        %v630 = vsel %vm629, %v622, 0
        %v631 = vsel %vm629, %v623, 0
        %632 = vst.msk [vmem:[#allocation2] sm:$0xf] %vm568, %v630
        %633 = vst.msk [vmem:[#allocation2 + $0x4] sm:$0xf] %vm568, %v631
        %p634 = scmp.lt.s32.totalorder %s34, 1
        %s635 = scalar_select %p634, 1, 0
        %v636 = vstv %s635
        %vm637 = vcmp.eq.s32.totalorder %v636, 1
        %v638 = vsel %vm637, %v624, 0
        %v639 = vsel %vm637, %v625, 0
        %s640 = scalar_lea.vmem [#allocation2], 144
        %641 = vst.msk [vmem:[%s640] sm:$0xf] %vm568, %v638
        %642 = vst.msk [vmem:[%s640 + $0x4] sm:$0xf] %vm568, %v639
        %v643 = vld [vmem:[#allocation2] sm:$0xf]
        %v644 = vld [vmem:[#allocation2 + $0x4] sm:$0xf]
        %v645 = vld [vmem:[#allocation2 + $0x8] sm:$0xf]
        %v646 = vld [vmem:[#allocation2 + $0xc] sm:$0xf]
        %v647 = vld [vmem:[#allocation2 + $0x10] sm:$0xf]
        %v648 = vld [vmem:[#allocation2 + $0x14] sm:$0xf]
        %v649 = vld [vmem:[#allocation2 + $0x18] sm:$0xf]
        %v650 = vld [vmem:[#allocation2 + $0x1c] sm:$0xf]
        %v651 = vld [vmem:[#allocation2 + $0x20] sm:$0xf]
        %v652 = vld [vmem:[#allocation2 + $0x24] sm:$0xf]
        %v653 = vld [vmem:[#allocation2 + $0x28] sm:$0xf]
        %v654 = vld [vmem:[#allocation2 + $0x2c] sm:$0xf]
        %v655 = vld [vmem:[#allocation2 + $0x30] sm:$0xf]
        %v656 = vld [vmem:[#allocation2 + $0x34] sm:$0xf]
        %v657 = vld [vmem:[#allocation2 + $0x38] sm:$0xf]
        %v658 = vld [vmem:[#allocation2 + $0x3c] sm:$0xf]
        %v659 = vld [vmem:[#allocation2 + $0x40] sm:$0xf]
        %v660 = vld [vmem:[#allocation2 + $0x44] sm:$0xf]
        %v661 = vld [vmem:[#allocation2 + $0x48] sm:$0xf]
        %v662 = vld [vmem:[#allocation2 + $0x4c] sm:$0xf]
        %v663 = vld [vmem:[#allocation2 + $0x50] sm:$0xf]
        %v664 = vld [vmem:[#allocation2 + $0x54] sm:$0xf]
        %v665 = vld [vmem:[#allocation2 + $0x58] sm:$0xf]
        %v666 = vld [vmem:[#allocation2 + $0x5c] sm:$0xf]
        %v667 = vld [vmem:[#allocation2 + $0x60] sm:$0xf]
        %v668 = vld [vmem:[#allocation2 + $0x64] sm:$0xf]
        %v669 = vld [vmem:[#allocation2 + $0x68] sm:$0xf]
        %v670 = vld [vmem:[#allocation2 + $0x6c] sm:$0xf]
        %v671 = vld [vmem:[#allocation2 + $0x70] sm:$0xf]
        %v672 = vld [vmem:[#allocation2 + $0x74] sm:$0xf]
        %v673 = vld [vmem:[#allocation2 + $0x78] sm:$0xf]
        %v674 = vld [vmem:[#allocation2 + $0x7c] sm:$0xf]
        %v675 = vld [vmem:[#allocation8] sm:$0xf]
        %v676 = vld [vmem:[#allocation8 + $0x4] sm:$0xf]
        %v677 = vld [vmem:[%s605] sm:$0xf]
        %v678 = vld [vmem:[%s605 + $0x4] sm:$0xf]
        %v679 = vld [vmem:[%s605 + $0x8] sm:$0xf]
        %v680 = vld [vmem:[%s605 + $0xc] sm:$0xf]
        %v681 = vld [vmem:[%s605 + $0x10] sm:$0xf]
        %v682 = vld [vmem:[%s605 + $0x14] sm:$0xf]
        %v683 = vld [vmem:[%s605 + $0x18] sm:$0xf]
        %v684 = vld [vmem:[%s605 + $0x1c] sm:$0xf]
        %v685 = vld [vmem:[%s605 + $0x20] sm:$0xf]
        %v686 = vld [vmem:[%s605 + $0x24] sm:$0xf]
        %v687 = vld [vmem:[%s605 + $0x28] sm:$0xf]
        %v688 = vld [vmem:[%s605 + $0x2c] sm:$0xf]
        %v689 = vld [vmem:[%s605 + $0x30] sm:$0xf]
        %v690 = vld [vmem:[%s605 + $0x34] sm:$0xf]
        %v691 = vld [vmem:[%s605 + $0x38] sm:$0xf]
        %v692 = vld [vmem:[%s605 + $0x3c] sm:$0xf]
        %v693 = vld [vmem:[%s605 + $0x40] sm:$0xf]
        %v694 = vld [vmem:[%s605 + $0x44] sm:$0xf]
        %v695 = vld [vmem:[%s605 + $0x48] sm:$0xf]
        %v696 = vld [vmem:[%s605 + $0x4c] sm:$0xf]
        %v697 = vld [vmem:[%s605 + $0x50] sm:$0xf]
        %v698 = vld [vmem:[%s605 + $0x54] sm:$0xf]
        %v699 = vld [vmem:[%s605 + $0x58] sm:$0xf]
        %v700 = vld [vmem:[%s605 + $0x5c] sm:$0xf]
        %v701 = vld [vmem:[%s605 + $0x60] sm:$0xf]
        %v702 = vld [vmem:[%s605 + $0x64] sm:$0xf]
        %v703 = vld [vmem:[%s605 + $0x68] sm:$0xf]
        %v704 = vld [vmem:[%s605 + $0x6c] sm:$0xf]
        %v705 = vld [vmem:[%s605 + $0x70] sm:$0xf]
        %v706 = vld [vmem:[%s605 + $0x74] sm:$0xf]
        %v707 = vld [vmem:[%s605 + $0x78] sm:$0xf]
        %v708 = vld [vmem:[%s605 + $0x7c] sm:$0xf]
        %s709 = scalar_lea.vmem [#allocation8], 8
        %v710 = vld [vmem:[%s709] sm:$0xf]
        %v711 = vld [vmem:[%s709 + $0x4] sm:$0xf]
        %v744 = vunpack.c.l.b16 %v677
        %v745 = vunpack.c.l.b16 %v678
        %v746 = vunpack.c.l.b16 %v679
        %v747 = vunpack.c.l.b16 %v680
        %v748 = vunpack.c.l.b16 %v681
        %v749 = vunpack.c.l.b16 %v682
        %v750 = vunpack.c.l.b16 %v683
        %v751 = vunpack.c.l.b16 %v684
        %v752 = vunpack.c.l.b16 %v685
        %v753 = vunpack.c.l.b16 %v686
        %v754 = vunpack.c.l.b16 %v687
        %v755 = vunpack.c.l.b16 %v688
        %v756 = vunpack.c.l.b16 %v689
        %v757 = vunpack.c.l.b16 %v690
        %v758 = vunpack.c.l.b16 %v691
        %v759 = vunpack.c.l.b16 %v692
        %v760 = vunpack.c.l.b16 %v693
        %v761 = vunpack.c.l.b16 %v694
        %v762 = vunpack.c.l.b16 %v695
        %v763 = vunpack.c.l.b16 %v696
        %v764 = vunpack.c.l.b16 %v697
        %v765 = vunpack.c.l.b16 %v698
        %v766 = vunpack.c.l.b16 %v699
        %v767 = vunpack.c.l.b16 %v700
        %v768 = vunpack.c.l.b16 %v701
        %v769 = vunpack.c.l.b16 %v702
        %v770 = vunpack.c.l.b16 %v703
        %v771 = vunpack.c.l.b16 %v704
        %v772 = vunpack.c.l.b16 %v705
        %v773 = vunpack.c.l.b16 %v706
        %v774 = vunpack.c.l.b16 %v707
        %v775 = vunpack.c.l.b16 %v708
        %v776 = vpack.c.b16 %v745, %v744
        %v777 = vpack.c.b16 %v747, %v746
        %v778 = vpack.c.b16 %v749, %v748
        %v779 = vpack.c.b16 %v751, %v750
        %v780 = vpack.c.b16 %v753, %v752
        %v781 = vpack.c.b16 %v755, %v754
        %v782 = vpack.c.b16 %v757, %v756
        %v783 = vpack.c.b16 %v759, %v758
        %v784 = vpack.c.b16 %v761, %v760
        %v785 = vpack.c.b16 %v763, %v762
        %v786 = vpack.c.b16 %v765, %v764
        %v787 = vpack.c.b16 %v767, %v766
        %v788 = vpack.c.b16 %v769, %v768
        %v789 = vpack.c.b16 %v771, %v770
        %v790 = vpack.c.b16 %v773, %v772
        %v791 = vpack.c.b16 %v775, %v774
        %v794 = vunpack.c.l.b16 %v710
        %v795 = vunpack.c.l.b16 %v711
        %v796 = vpack.c.b16 %v795, %v794
        %vm798 = vcmask 130048
        %v800 = vsel %vm798, %v776, 0
        %v803 = vsel %vm798, %v777, 0
        %v806 = vsel %vm798, %v778, 0
        %v809 = vsel %vm798, %v779, 0
        %v812 = vsel %vm798, %v780, 0
        %v815 = vsel %vm798, %v781, 0
        %v818 = vsel %vm798, %v782, 0
        %v821 = vsel %vm798, %v783, 0
        %v824 = vsel %vm798, %v784, 0
        %v827 = vsel %vm798, %v785, 0
        %v830 = vsel %vm798, %v786, 0
        %v833 = vsel %vm798, %v787, 0
        %v836 = vsel %vm798, %v788, 0
        %v839 = vsel %vm798, %v789, 0
        %v842 = vsel %vm798, %v790, 0
        %v845 = vsel %vm798, %v791, 0
        %847 = vmatprep.subr.bf16.mxu0 0
        %848 = vmatpush1.bf16.msra.mxu0 0
        %849 = vmatprep.subr.bf16.mxu0 0
        %850 = vmatpush1.bf16.msra.mxu0 0
        %851 = vmatprep.subr.bf16.mxu0 0
        %852 = vmatpush1.bf16.msra.mxu0 0
        %853 = vmatprep.subr.bf16.mxu0 0
        %854 = vmatpush1.bf16.msra.mxu0 0
        %855 = vmatprep.subr.bf16.mxu0 0
        %856 = vmatpush1.bf16.msra.mxu0 0
        %857 = vmatprep.subr.bf16.mxu0 0
        %858 = vmatpush1.bf16.msra.mxu0 0
        %859 = vmatprep.subr.bf16.mxu0 0
        %860 = vmatpush1.bf16.msra.mxu0 0
        %861 = vmatprep.subr.bf16.mxu0 0
        %862 = vmatpush1.bf16.msra.mxu0 %v796
        %863 = vmatprep.subr.bf16.mxu0 0
        %864 = vmatpush2.bf16.msra.mxu0 0
        %865 = vmatprep.subr.bf16.mxu0 0
        %866 = vmatpush2.bf16.msra.mxu0 0
        %867 = vmatprep.subr.bf16.mxu0 0
        %868 = vmatpush2.bf16.msra.mxu0 0
        %869 = vmatprep.subr.bf16.mxu0 0
        %870 = vmatpush2.bf16.msra.mxu0 0
        %871 = vmatprep.subr.bf16.mxu0 0
        %872 = vmatpush2.bf16.msra.mxu0 0
        %873 = vmatprep.subr.bf16.mxu0 0
        %874 = vmatpush2.bf16.msra.mxu0 0
        %875 = vmatprep.subr.bf16.mxu0 0
        %876 = vmatpush2.bf16.msra.mxu0 0
        %877 = vmatprep.subr.bf16.mxu0 0
        %878 = vmatpush2.bf16.msra.mxu0 0
        %879 = vmatprep.mubr.bf16.mxu0 0
        %880 = vmatmul.mubr.bf16.gmra.mxu0 %v800
        %v881 = vpop.f32.mrf.mxu0
        %v882 = vadd.f32 0.0, %v881
        %v883 = vpop.f32.mrf.mxu0
        %v884 = vpop.f32.mrf.mxu0
        %v885 = vadd.f32 0.0, %v884
        %v886 = vpop.f32.mrf.mxu0
        %887 = vmatprep.mubr.bf16.mxu0 0
        %888 = vmatmul.mubr.bf16.gmra.mxu0 %v803
        %v889 = vpop.f32.mrf.mxu0
        %v890 = vadd.f32 0.0, %v889
        %v891 = vpop.f32.mrf.mxu0
        %v892 = vpop.f32.mrf.mxu0
        %v893 = vadd.f32 0.0, %v892
        %v894 = vpop.f32.mrf.mxu0
        %895 = vmatprep.mubr.bf16.mxu0 0
        %896 = vmatmul.mubr.bf16.gmra.mxu0 %v806
        %v897 = vpop.f32.mrf.mxu0
        %v898 = vadd.f32 0.0, %v897
        %v899 = vpop.f32.mrf.mxu0
        %v900 = vpop.f32.mrf.mxu0
        %v901 = vadd.f32 0.0, %v900
        %v902 = vpop.f32.mrf.mxu0
        %903 = vmatprep.mubr.bf16.mxu0 0
        %904 = vmatmul.mubr.bf16.gmra.mxu0 %v809
        %v905 = vpop.f32.mrf.mxu0
        %v906 = vadd.f32 0.0, %v905
        %v907 = vpop.f32.mrf.mxu0
        %v908 = vpop.f32.mrf.mxu0
        %v909 = vadd.f32 0.0, %v908
        %v910 = vpop.f32.mrf.mxu0
        %911 = vmatprep.mubr.bf16.mxu0 0
        %912 = vmatmul.mubr.bf16.gmra.mxu0 %v812
        %v913 = vpop.f32.mrf.mxu0
        %v914 = vadd.f32 0.0, %v913
        %v915 = vpop.f32.mrf.mxu0
        %v916 = vpop.f32.mrf.mxu0
        %v917 = vadd.f32 0.0, %v916
        %v918 = vpop.f32.mrf.mxu0
        %919 = vmatprep.mubr.bf16.mxu0 0
        %920 = vmatmul.mubr.bf16.gmra.mxu0 %v815
        %v921 = vpop.f32.mrf.mxu0
        %v922 = vadd.f32 0.0, %v921
        %v923 = vpop.f32.mrf.mxu0
        %v924 = vpop.f32.mrf.mxu0
        %v925 = vadd.f32 0.0, %v924
        %v926 = vpop.f32.mrf.mxu0
        %927 = vmatprep.mubr.bf16.mxu0 0
        %928 = vmatmul.mubr.bf16.gmra.mxu0 %v818
        %v929 = vpop.f32.mrf.mxu0
        %v930 = vadd.f32 0.0, %v929
        %v931 = vpop.f32.mrf.mxu0
        %v932 = vpop.f32.mrf.mxu0
        %v933 = vadd.f32 0.0, %v932
        %v934 = vpop.f32.mrf.mxu0
        %935 = vmatprep.mubr.bf16.mxu0 0
        %936 = vmatmul.mubr.bf16.gmra.mxu0 %v821
        %v937 = vpop.f32.mrf.mxu0
        %v938 = vadd.f32 0.0, %v937
        %v939 = vpop.f32.mrf.mxu0
        %v940 = vpop.f32.mrf.mxu0
        %v941 = vadd.f32 0.0, %v940
        %v942 = vpop.f32.mrf.mxu0
        %943 = vmatprep.mubr.bf16.mxu0 0
        %944 = vmatmul.mubr.bf16.gmra.mxu0 %v824
        %v945 = vpop.f32.mrf.mxu0
        %v946 = vadd.f32 0.0, %v945
        %v947 = vpop.f32.mrf.mxu0
        %v948 = vpop.f32.mrf.mxu0
        %v949 = vadd.f32 0.0, %v948
        %v950 = vpop.f32.mrf.mxu0
        %951 = vmatprep.mubr.bf16.mxu0 0
        %952 = vmatmul.mubr.bf16.gmra.mxu0 %v827
        %v953 = vpop.f32.mrf.mxu0
        %v954 = vadd.f32 0.0, %v953
        %v955 = vpop.f32.mrf.mxu0
        %v956 = vpop.f32.mrf.mxu0
        %v957 = vadd.f32 0.0, %v956
        %v958 = vpop.f32.mrf.mxu0
        %959 = vmatprep.mubr.bf16.mxu0 0
        %960 = vmatmul.mubr.bf16.gmra.mxu0 %v830
        %v961 = vpop.f32.mrf.mxu0
        %v962 = vadd.f32 0.0, %v961
        %v963 = vpop.f32.mrf.mxu0
        %v964 = vpop.f32.mrf.mxu0
        %v965 = vadd.f32 0.0, %v964
        %v966 = vpop.f32.mrf.mxu0
        %967 = vmatprep.mubr.bf16.mxu0 0
        %968 = vmatmul.mubr.bf16.gmra.mxu0 %v833
        %v969 = vpop.f32.mrf.mxu0
        %v970 = vadd.f32 0.0, %v969
        %v971 = vpop.f32.mrf.mxu0
        %v972 = vpop.f32.mrf.mxu0
        %v973 = vadd.f32 0.0, %v972
        %v974 = vpop.f32.mrf.mxu0
        %975 = vmatprep.mubr.bf16.mxu0 0
        %976 = vmatmul.mubr.bf16.gmra.mxu0 %v836
        %v977 = vpop.f32.mrf.mxu0
        %v978 = vadd.f32 0.0, %v977
        %v979 = vpop.f32.mrf.mxu0
        %v980 = vpop.f32.mrf.mxu0
        %v981 = vadd.f32 0.0, %v980
        %v982 = vpop.f32.mrf.mxu0
        %983 = vmatprep.mubr.bf16.mxu0 0
        %984 = vmatmul.mubr.bf16.gmra.mxu0 %v839
        %v985 = vpop.f32.mrf.mxu0
        %v986 = vadd.f32 0.0, %v985
        %v987 = vpop.f32.mrf.mxu0
        %v988 = vpop.f32.mrf.mxu0
        %v989 = vadd.f32 0.0, %v988
        %v990 = vpop.f32.mrf.mxu0
        %991 = vmatprep.mubr.bf16.mxu0 0
        %992 = vmatmul.mubr.bf16.gmra.mxu0 %v842
        %v993 = vpop.f32.mrf.mxu0
        %v994 = vadd.f32 0.0, %v993
        %v995 = vpop.f32.mrf.mxu0
        %v996 = vpop.f32.mrf.mxu0
        %v997 = vadd.f32 0.0, %v996
        %v998 = vpop.f32.mrf.mxu0
        %999 = vmatprep.mubr.bf16.mxu0 0
        %1000 = vmatmul.mubr.bf16.gmra.mxu0 %v845
        %v1001 = vpop.f32.mrf.mxu0
        %v1002 = vadd.f32 0.0, %v1001
        %v1003 = vpop.f32.mrf.mxu0
        %v1004 = vpop.f32.mrf.mxu0
        %v1005 = vadd.f32 0.0, %v1004
        %v1006 = vpop.f32.mrf.mxu0
        %1007 = vdwg.mxu0
        %v1040 = vunpack.c.l.b16 %v643
        %v1041 = vunpack.c.l.b16 %v644
        %v1042 = vunpack.c.l.b16 %v645
        %v1043 = vunpack.c.l.b16 %v646
        %v1044 = vunpack.c.l.b16 %v647
        %v1045 = vunpack.c.l.b16 %v648
        %v1046 = vunpack.c.l.b16 %v649
        %v1047 = vunpack.c.l.b16 %v650
        %v1048 = vunpack.c.l.b16 %v651
        %v1049 = vunpack.c.l.b16 %v652
        %v1050 = vunpack.c.l.b16 %v653
        %v1051 = vunpack.c.l.b16 %v654
        %v1052 = vunpack.c.l.b16 %v655
        %v1053 = vunpack.c.l.b16 %v656
        %v1054 = vunpack.c.l.b16 %v657
        %v1055 = vunpack.c.l.b16 %v658
        %v1056 = vunpack.c.l.b16 %v659
        %v1057 = vunpack.c.l.b16 %v660
        %v1058 = vunpack.c.l.b16 %v661
        %v1059 = vunpack.c.l.b16 %v662
        %v1060 = vunpack.c.l.b16 %v663
        %v1061 = vunpack.c.l.b16 %v664
        %v1062 = vunpack.c.l.b16 %v665
        %v1063 = vunpack.c.l.b16 %v666
        %v1064 = vunpack.c.l.b16 %v667
        %v1065 = vunpack.c.l.b16 %v668
        %v1066 = vunpack.c.l.b16 %v669
        %v1067 = vunpack.c.l.b16 %v670
        %v1068 = vunpack.c.l.b16 %v671
        %v1069 = vunpack.c.l.b16 %v672
        %v1070 = vunpack.c.l.b16 %v673
        %v1071 = vunpack.c.l.b16 %v674
        %v1072 = vpack.c.b16 %v1041, %v1040
        %v1073 = vpack.c.b16 %v1043, %v1042
        %v1074 = vpack.c.b16 %v1045, %v1044
        %v1075 = vpack.c.b16 %v1047, %v1046
        %v1076 = vpack.c.b16 %v1049, %v1048
        %v1077 = vpack.c.b16 %v1051, %v1050
        %v1078 = vpack.c.b16 %v1053, %v1052
        %v1079 = vpack.c.b16 %v1055, %v1054
        %v1080 = vpack.c.b16 %v1057, %v1056
        %v1081 = vpack.c.b16 %v1059, %v1058
        %v1082 = vpack.c.b16 %v1061, %v1060
        %v1083 = vpack.c.b16 %v1063, %v1062
        %v1084 = vpack.c.b16 %v1065, %v1064
        %v1085 = vpack.c.b16 %v1067, %v1066
        %v1086 = vpack.c.b16 %v1069, %v1068
        %v1087 = vpack.c.b16 %v1071, %v1070
        %v1090 = vunpack.c.l.b16 %v675
        %v1091 = vunpack.c.l.b16 %v676
        %v1092 = vpack.c.b16 %v1091, %v1090
        %v1095 = vsel %vm798, %v1072, 0
        %v1098 = vsel %vm798, %v1073, 0
        %v1101 = vsel %vm798, %v1074, 0
        %v1104 = vsel %vm798, %v1075, 0
        %v1107 = vsel %vm798, %v1076, 0
        %v1110 = vsel %vm798, %v1077, 0
        %v1113 = vsel %vm798, %v1078, 0
        %v1116 = vsel %vm798, %v1079, 0
        %v1119 = vsel %vm798, %v1080, 0
        %v1122 = vsel %vm798, %v1081, 0
        %v1125 = vsel %vm798, %v1082, 0
        %v1128 = vsel %vm798, %v1083, 0
        %v1131 = vsel %vm798, %v1084, 0
        %v1134 = vsel %vm798, %v1085, 0
        %v1137 = vsel %vm798, %v1086, 0
        %v1140 = vsel %vm798, %v1087, 0
        %1142 = vmatprep.subr.bf16.mxu0 0
        %1143 = vmatpush1.bf16.msra.mxu0 0
        %1144 = vmatprep.subr.bf16.mxu0 0
        %1145 = vmatpush1.bf16.msra.mxu0 0
        %1146 = vmatprep.subr.bf16.mxu0 0
        %1147 = vmatpush1.bf16.msra.mxu0 0
        %1148 = vmatprep.subr.bf16.mxu0 0
        %1149 = vmatpush1.bf16.msra.mxu0 0
        %1150 = vmatprep.subr.bf16.mxu0 0
        %1151 = vmatpush1.bf16.msra.mxu0 0
        %1152 = vmatprep.subr.bf16.mxu0 0
        %1153 = vmatpush1.bf16.msra.mxu0 0
        %1154 = vmatprep.subr.bf16.mxu0 0
        %1155 = vmatpush1.bf16.msra.mxu0 0
        %1156 = vmatprep.subr.bf16.mxu0 0
        %1157 = vmatpush1.bf16.msra.mxu0 %v1092
        %1158 = vmatprep.subr.bf16.mxu0 0
        %1159 = vmatpush2.bf16.msra.mxu0 0
        %1160 = vmatprep.subr.bf16.mxu0 0
        %1161 = vmatpush2.bf16.msra.mxu0 0
        %1162 = vmatprep.subr.bf16.mxu0 0
        %1163 = vmatpush2.bf16.msra.mxu0 0
        %1164 = vmatprep.subr.bf16.mxu0 0
        %1165 = vmatpush2.bf16.msra.mxu0 0
        %1166 = vmatprep.subr.bf16.mxu0 0
        %1167 = vmatpush2.bf16.msra.mxu0 0
        %1168 = vmatprep.subr.bf16.mxu0 0
        %1169 = vmatpush2.bf16.msra.mxu0 0
        %1170 = vmatprep.subr.bf16.mxu0 0
        %1171 = vmatpush2.bf16.msra.mxu0 0
        %1172 = vmatprep.subr.bf16.mxu0 0
        %1173 = vmatpush2.bf16.msra.mxu0 0
        %1174 = vmatprep.mubr.bf16.mxu0 0
        %1175 = vmatmul.mubr.bf16.gmra.mxu0 %v1095
        %v1176 = vpop.f32.mrf.mxu0
        %v1177 = vadd.f32 %v882, %v1176
        %v1178 = vpop.f32.mrf.mxu0
        %v1179 = vpop.f32.mrf.mxu0
        %v1180 = vadd.f32 %v885, %v1179
        %v1181 = vpop.f32.mrf.mxu0
        %1182 = vmatprep.mubr.bf16.mxu0 0
        %1183 = vmatmul.mubr.bf16.gmra.mxu0 %v1098
        %v1184 = vpop.f32.mrf.mxu0
        %v1185 = vadd.f32 %v890, %v1184
        %v1186 = vpop.f32.mrf.mxu0
        %v1187 = vpop.f32.mrf.mxu0
        %v1188 = vadd.f32 %v893, %v1187
        %v1189 = vpop.f32.mrf.mxu0
        %1190 = vmatprep.mubr.bf16.mxu0 0
        %1191 = vmatmul.mubr.bf16.gmra.mxu0 %v1101
        %v1192 = vpop.f32.mrf.mxu0
        %v1193 = vadd.f32 %v898, %v1192
        %v1194 = vpop.f32.mrf.mxu0
        %v1195 = vpop.f32.mrf.mxu0
        %v1196 = vadd.f32 %v901, %v1195
        %v1197 = vpop.f32.mrf.mxu0
        %1198 = vmatprep.mubr.bf16.mxu0 0
        %1199 = vmatmul.mubr.bf16.gmra.mxu0 %v1104
        %v1200 = vpop.f32.mrf.mxu0
        %v1201 = vadd.f32 %v906, %v1200
        %v1202 = vpop.f32.mrf.mxu0
        %v1203 = vpop.f32.mrf.mxu0
        %v1204 = vadd.f32 %v909, %v1203
        %v1205 = vpop.f32.mrf.mxu0
        %1206 = vmatprep.mubr.bf16.mxu0 0
        %1207 = vmatmul.mubr.bf16.gmra.mxu0 %v1107
        %v1208 = vpop.f32.mrf.mxu0
        %v1209 = vadd.f32 %v914, %v1208
        %v1210 = vpop.f32.mrf.mxu0
        %v1211 = vpop.f32.mrf.mxu0
        %v1212 = vadd.f32 %v917, %v1211
        %v1213 = vpop.f32.mrf.mxu0
        %1214 = vmatprep.mubr.bf16.mxu0 0
        %1215 = vmatmul.mubr.bf16.gmra.mxu0 %v1110
        %v1216 = vpop.f32.mrf.mxu0
        %v1217 = vadd.f32 %v922, %v1216
        %v1218 = vpop.f32.mrf.mxu0
        %v1219 = vpop.f32.mrf.mxu0
        %v1220 = vadd.f32 %v925, %v1219
        %v1221 = vpop.f32.mrf.mxu0
        %1222 = vmatprep.mubr.bf16.mxu0 0
        %1223 = vmatmul.mubr.bf16.gmra.mxu0 %v1113
        %v1224 = vpop.f32.mrf.mxu0
        %v1225 = vadd.f32 %v930, %v1224
        %v1226 = vpop.f32.mrf.mxu0
        %v1227 = vpop.f32.mrf.mxu0
        %v1228 = vadd.f32 %v933, %v1227
        %v1229 = vpop.f32.mrf.mxu0
        %1230 = vmatprep.mubr.bf16.mxu0 0
        %1231 = vmatmul.mubr.bf16.gmra.mxu0 %v1116
        %v1232 = vpop.f32.mrf.mxu0
        %v1233 = vadd.f32 %v938, %v1232
        %v1234 = vpop.f32.mrf.mxu0
        %v1235 = vpop.f32.mrf.mxu0
        %v1236 = vadd.f32 %v941, %v1235
        %v1237 = vpop.f32.mrf.mxu0
        %1238 = vmatprep.mubr.bf16.mxu0 0
        %1239 = vmatmul.mubr.bf16.gmra.mxu0 %v1119
        %v1240 = vpop.f32.mrf.mxu0
        %v1241 = vadd.f32 %v946, %v1240
        %v1242 = vpop.f32.mrf.mxu0
        %v1243 = vpop.f32.mrf.mxu0
        %v1244 = vadd.f32 %v949, %v1243
        %v1245 = vpop.f32.mrf.mxu0
        %1246 = vmatprep.mubr.bf16.mxu0 0
        %1247 = vmatmul.mubr.bf16.gmra.mxu0 %v1122
        %v1248 = vpop.f32.mrf.mxu0
        %v1249 = vadd.f32 %v954, %v1248
        %v1250 = vpop.f32.mrf.mxu0
        %v1251 = vpop.f32.mrf.mxu0
        %v1252 = vadd.f32 %v957, %v1251
        %v1253 = vpop.f32.mrf.mxu0
        %1254 = vmatprep.mubr.bf16.mxu0 0
        %1255 = vmatmul.mubr.bf16.gmra.mxu0 %v1125
        %v1256 = vpop.f32.mrf.mxu0
        %v1257 = vadd.f32 %v962, %v1256
        %v1258 = vpop.f32.mrf.mxu0
        %v1259 = vpop.f32.mrf.mxu0
        %v1260 = vadd.f32 %v965, %v1259
        %v1261 = vpop.f32.mrf.mxu0
        %1262 = vmatprep.mubr.bf16.mxu0 0
        %1263 = vmatmul.mubr.bf16.gmra.mxu0 %v1128
        %v1264 = vpop.f32.mrf.mxu0
        %v1265 = vadd.f32 %v970, %v1264
        %v1266 = vpop.f32.mrf.mxu0
        %v1267 = vpop.f32.mrf.mxu0
        %v1268 = vadd.f32 %v973, %v1267
        %v1269 = vpop.f32.mrf.mxu0
        %1270 = vmatprep.mubr.bf16.mxu0 0
        %1271 = vmatmul.mubr.bf16.gmra.mxu0 %v1131
        %v1272 = vpop.f32.mrf.mxu0
        %v1273 = vadd.f32 %v978, %v1272
        %v1274 = vpop.f32.mrf.mxu0
        %v1275 = vpop.f32.mrf.mxu0
        %v1276 = vadd.f32 %v981, %v1275
        %v1277 = vpop.f32.mrf.mxu0
        %1278 = vmatprep.mubr.bf16.mxu0 0
        %1279 = vmatmul.mubr.bf16.gmra.mxu0 %v1134
        %v1280 = vpop.f32.mrf.mxu0
        %v1281 = vadd.f32 %v986, %v1280
        %v1282 = vpop.f32.mrf.mxu0
        %v1283 = vpop.f32.mrf.mxu0
        %v1284 = vadd.f32 %v989, %v1283
        %v1285 = vpop.f32.mrf.mxu0
        %1286 = vmatprep.mubr.bf16.mxu0 0
        %1287 = vmatmul.mubr.bf16.gmra.mxu0 %v1137
        %v1288 = vpop.f32.mrf.mxu0
        %v1289 = vadd.f32 %v994, %v1288
        %v1290 = vpop.f32.mrf.mxu0
        %v1291 = vpop.f32.mrf.mxu0
        %v1292 = vadd.f32 %v997, %v1291
        %v1293 = vpop.f32.mrf.mxu0
        %1294 = vmatprep.mubr.bf16.mxu0 0
        %1295 = vmatmul.mubr.bf16.gmra.mxu0 %v1140
        %v1296 = vpop.f32.mrf.mxu0
        %v1297 = vadd.f32 %v1002, %v1296
        %v1298 = vpop.f32.mrf.mxu0
        %v1299 = vpop.f32.mrf.mxu0
        %v1300 = vadd.f32 %v1005, %v1299
        %v1301 = vpop.f32.mrf.mxu0
        %1302 = vdwg.mxu0
        %s1303 = scalar_lea.vmem [#allocation2], 32
        %v1304 = vld [vmem:[%s1303] sm:$0xf]
        %v1305 = vld [vmem:[%s1303 + $0x4] sm:$0xf]
        %v1306 = vld [vmem:[%s1303 + $0x8] sm:$0xf]
        %v1307 = vld [vmem:[%s1303 + $0xc] sm:$0xf]
        %v1308 = vld [vmem:[%s1303 + $0x10] sm:$0xf]
        %v1309 = vld [vmem:[%s1303 + $0x14] sm:$0xf]
        %v1310 = vld [vmem:[%s1303 + $0x18] sm:$0xf]
        %v1311 = vld [vmem:[%s1303 + $0x1c] sm:$0xf]
        %v1312 = vld [vmem:[%s1303 + $0x20] sm:$0xf]
        %v1313 = vld [vmem:[%s1303 + $0x24] sm:$0xf]
        %v1314 = vld [vmem:[%s1303 + $0x28] sm:$0xf]
        %v1315 = vld [vmem:[%s1303 + $0x2c] sm:$0xf]
        %v1316 = vld [vmem:[%s1303 + $0x30] sm:$0xf]
        %v1317 = vld [vmem:[%s1303 + $0x34] sm:$0xf]
        %v1318 = vld [vmem:[%s1303 + $0x38] sm:$0xf]
        %v1319 = vld [vmem:[%s1303 + $0x3c] sm:$0xf]
        %v1320 = vld [vmem:[%s1303 + $0x40] sm:$0xf]
        %v1321 = vld [vmem:[%s1303 + $0x44] sm:$0xf]
        %v1322 = vld [vmem:[%s1303 + $0x48] sm:$0xf]
        %v1323 = vld [vmem:[%s1303 + $0x4c] sm:$0xf]
        %v1324 = vld [vmem:[%s1303 + $0x50] sm:$0xf]
        %v1325 = vld [vmem:[%s1303 + $0x54] sm:$0xf]
        %v1326 = vld [vmem:[%s1303 + $0x58] sm:$0xf]
        %v1327 = vld [vmem:[%s1303 + $0x5c] sm:$0xf]
        %v1328 = vld [vmem:[%s1303 + $0x60] sm:$0xf]
        %v1329 = vld [vmem:[%s1303 + $0x64] sm:$0xf]
        %v1330 = vld [vmem:[%s1303 + $0x68] sm:$0xf]
        %v1331 = vld [vmem:[%s1303 + $0x6c] sm:$0xf]
        %v1332 = vld [vmem:[%s1303 + $0x70] sm:$0xf]
        %v1333 = vld [vmem:[%s1303 + $0x74] sm:$0xf]
        %v1334 = vld [vmem:[%s1303 + $0x78] sm:$0xf]
        %v1335 = vld [vmem:[%s1303 + $0x7c] sm:$0xf]
        %s1336 = scalar_lea.vmem [#allocation8], 16
        %v1337 = vld [vmem:[%s1336] sm:$0xf]
        %v1338 = vld [vmem:[%s1336 + $0x4] sm:$0xf]
        %v1371 = vunpack.c.l.b16 %v1304
        %v1372 = vunpack.c.l.b16 %v1305
        %v1373 = vunpack.c.l.b16 %v1306
        %v1374 = vunpack.c.l.b16 %v1307
        %v1375 = vunpack.c.l.b16 %v1308
        %v1376 = vunpack.c.l.b16 %v1309
        %v1377 = vunpack.c.l.b16 %v1310
        %v1378 = vunpack.c.l.b16 %v1311
        %v1379 = vunpack.c.l.b16 %v1312
        %v1380 = vunpack.c.l.b16 %v1313
        %v1381 = vunpack.c.l.b16 %v1314
        %v1382 = vunpack.c.l.b16 %v1315
        %v1383 = vunpack.c.l.b16 %v1316
        %v1384 = vunpack.c.l.b16 %v1317
        %v1385 = vunpack.c.l.b16 %v1318
        %v1386 = vunpack.c.l.b16 %v1319
        %v1387 = vunpack.c.l.b16 %v1320
        %v1388 = vunpack.c.l.b16 %v1321
        %v1389 = vunpack.c.l.b16 %v1322
        %v1390 = vunpack.c.l.b16 %v1323
        %v1391 = vunpack.c.l.b16 %v1324
        %v1392 = vunpack.c.l.b16 %v1325
        %v1393 = vunpack.c.l.b16 %v1326
        %v1394 = vunpack.c.l.b16 %v1327
        %v1395 = vunpack.c.l.b16 %v1328
        %v1396 = vunpack.c.l.b16 %v1329
        %v1397 = vunpack.c.l.b16 %v1330
        %v1398 = vunpack.c.l.b16 %v1331
        %v1399 = vunpack.c.l.b16 %v1332
        %v1400 = vunpack.c.l.b16 %v1333
        %v1401 = vunpack.c.l.b16 %v1334
        %v1402 = vunpack.c.l.b16 %v1335
        %v1403 = vpack.c.b16 %v1372, %v1371
        %v1404 = vpack.c.b16 %v1374, %v1373
        %v1405 = vpack.c.b16 %v1376, %v1375
        %v1406 = vpack.c.b16 %v1378, %v1377
        %v1407 = vpack.c.b16 %v1380, %v1379
        %v1408 = vpack.c.b16 %v1382, %v1381
        %v1409 = vpack.c.b16 %v1384, %v1383
        %v1410 = vpack.c.b16 %v1386, %v1385
        %v1411 = vpack.c.b16 %v1388, %v1387
        %v1412 = vpack.c.b16 %v1390, %v1389
        %v1413 = vpack.c.b16 %v1392, %v1391
        %v1414 = vpack.c.b16 %v1394, %v1393
        %v1415 = vpack.c.b16 %v1396, %v1395
        %v1416 = vpack.c.b16 %v1398, %v1397
        %v1417 = vpack.c.b16 %v1400, %v1399
        %v1418 = vpack.c.b16 %v1402, %v1401
        %v1421 = vunpack.c.l.b16 %v1337
        %v1422 = vunpack.c.l.b16 %v1338
        %v1423 = vpack.c.b16 %v1422, %v1421
        %v1426 = vsel %vm798, %v1403, 0
        %v1429 = vsel %vm798, %v1404, 0
        %v1432 = vsel %vm798, %v1405, 0
        %v1435 = vsel %vm798, %v1406, 0
        %v1438 = vsel %vm798, %v1407, 0
        %v1441 = vsel %vm798, %v1408, 0
        %v1444 = vsel %vm798, %v1409, 0
        %v1447 = vsel %vm798, %v1410, 0
        %v1450 = vsel %vm798, %v1411, 0
        %v1453 = vsel %vm798, %v1412, 0
        %v1456 = vsel %vm798, %v1413, 0
        %v1459 = vsel %vm798, %v1414, 0
        %v1462 = vsel %vm798, %v1415, 0
        %v1465 = vsel %vm798, %v1416, 0
        %v1468 = vsel %vm798, %v1417, 0
        %v1471 = vsel %vm798, %v1418, 0
        %1473 = vmatprep.subr.bf16.mxu0 0
        %1474 = vmatpush1.bf16.msra.mxu0 0
        %1475 = vmatprep.subr.bf16.mxu0 0
        %1476 = vmatpush1.bf16.msra.mxu0 0
        %1477 = vmatprep.subr.bf16.mxu0 0
        %1478 = vmatpush1.bf16.msra.mxu0 0
        %1479 = vmatprep.subr.bf16.mxu0 0
        %1480 = vmatpush1.bf16.msra.mxu0 0
        %1481 = vmatprep.subr.bf16.mxu0 0
        %1482 = vmatpush1.bf16.msra.mxu0 0
        %1483 = vmatprep.subr.bf16.mxu0 0
        %1484 = vmatpush1.bf16.msra.mxu0 0
        %1485 = vmatprep.subr.bf16.mxu0 0
        %1486 = vmatpush1.bf16.msra.mxu0 0
        %1487 = vmatprep.subr.bf16.mxu0 0
        %1488 = vmatpush1.bf16.msra.mxu0 %v1423
        %1489 = vmatprep.subr.bf16.mxu0 0
        %1490 = vmatpush2.bf16.msra.mxu0 0
        %1491 = vmatprep.subr.bf16.mxu0 0
        %1492 = vmatpush2.bf16.msra.mxu0 0
        %1493 = vmatprep.subr.bf16.mxu0 0
        %1494 = vmatpush2.bf16.msra.mxu0 0
        %1495 = vmatprep.subr.bf16.mxu0 0
        %1496 = vmatpush2.bf16.msra.mxu0 0
        %1497 = vmatprep.subr.bf16.mxu0 0
        %1498 = vmatpush2.bf16.msra.mxu0 0
        %1499 = vmatprep.subr.bf16.mxu0 0
        %1500 = vmatpush2.bf16.msra.mxu0 0
        %1501 = vmatprep.subr.bf16.mxu0 0
        %1502 = vmatpush2.bf16.msra.mxu0 0
        %1503 = vmatprep.subr.bf16.mxu0 0
        %1504 = vmatpush2.bf16.msra.mxu0 0
        %1505 = vmatprep.mubr.bf16.mxu0 0
        %1506 = vmatmul.mubr.bf16.gmra.mxu0 %v1426
        %v1507 = vpop.f32.mrf.mxu0
        %v1508 = vadd.f32 0.0, %v1507
        %v1509 = vpop.f32.mrf.mxu0
        %v1510 = vpop.f32.mrf.mxu0
        %v1511 = vadd.f32 0.0, %v1510
        %v1512 = vpop.f32.mrf.mxu0
        %1513 = vmatprep.mubr.bf16.mxu0 0
        %1514 = vmatmul.mubr.bf16.gmra.mxu0 %v1429
        %v1515 = vpop.f32.mrf.mxu0
        %v1516 = vadd.f32 0.0, %v1515
        %v1517 = vpop.f32.mrf.mxu0
        %v1518 = vpop.f32.mrf.mxu0
        %v1519 = vadd.f32 0.0, %v1518
        %v1520 = vpop.f32.mrf.mxu0
        %1521 = vmatprep.mubr.bf16.mxu0 0
        %1522 = vmatmul.mubr.bf16.gmra.mxu0 %v1432
        %v1523 = vpop.f32.mrf.mxu0
        %v1524 = vadd.f32 0.0, %v1523
        %v1525 = vpop.f32.mrf.mxu0
        %v1526 = vpop.f32.mrf.mxu0
        %v1527 = vadd.f32 0.0, %v1526
        %v1528 = vpop.f32.mrf.mxu0
        %1529 = vmatprep.mubr.bf16.mxu0 0
        %1530 = vmatmul.mubr.bf16.gmra.mxu0 %v1435
        %v1531 = vpop.f32.mrf.mxu0
        %v1532 = vadd.f32 0.0, %v1531
        %v1533 = vpop.f32.mrf.mxu0
        %v1534 = vpop.f32.mrf.mxu0
        %v1535 = vadd.f32 0.0, %v1534
        %v1536 = vpop.f32.mrf.mxu0
        %1537 = vmatprep.mubr.bf16.mxu0 0
        %1538 = vmatmul.mubr.bf16.gmra.mxu0 %v1438
        %v1539 = vpop.f32.mrf.mxu0
        %v1540 = vadd.f32 0.0, %v1539
        %v1541 = vpop.f32.mrf.mxu0
        %v1542 = vpop.f32.mrf.mxu0
        %v1543 = vadd.f32 0.0, %v1542
        %v1544 = vpop.f32.mrf.mxu0
        %1545 = vmatprep.mubr.bf16.mxu0 0
        %1546 = vmatmul.mubr.bf16.gmra.mxu0 %v1441
        %v1547 = vpop.f32.mrf.mxu0
        %v1548 = vadd.f32 0.0, %v1547
        %v1549 = vpop.f32.mrf.mxu0
        %v1550 = vpop.f32.mrf.mxu0
        %v1551 = vadd.f32 0.0, %v1550
        %v1552 = vpop.f32.mrf.mxu0
        %1553 = vmatprep.mubr.bf16.mxu0 0
        %1554 = vmatmul.mubr.bf16.gmra.mxu0 %v1444
        %v1555 = vpop.f32.mrf.mxu0
        %v1556 = vadd.f32 0.0, %v1555
        %v1557 = vpop.f32.mrf.mxu0
        %v1558 = vpop.f32.mrf.mxu0
        %v1559 = vadd.f32 0.0, %v1558
        %v1560 = vpop.f32.mrf.mxu0
        %1561 = vmatprep.mubr.bf16.mxu0 0
        %1562 = vmatmul.mubr.bf16.gmra.mxu0 %v1447
        %v1563 = vpop.f32.mrf.mxu0
        %v1564 = vadd.f32 0.0, %v1563
        %v1565 = vpop.f32.mrf.mxu0
        %v1566 = vpop.f32.mrf.mxu0
        %v1567 = vadd.f32 0.0, %v1566
        %v1568 = vpop.f32.mrf.mxu0
        %1569 = vmatprep.mubr.bf16.mxu0 0
        %1570 = vmatmul.mubr.bf16.gmra.mxu0 %v1450
        %v1571 = vpop.f32.mrf.mxu0
        %v1572 = vadd.f32 0.0, %v1571
        %v1573 = vpop.f32.mrf.mxu0
        %v1574 = vpop.f32.mrf.mxu0
        %v1575 = vadd.f32 0.0, %v1574
        %v1576 = vpop.f32.mrf.mxu0
        %1577 = vmatprep.mubr.bf16.mxu0 0
        %1578 = vmatmul.mubr.bf16.gmra.mxu0 %v1453
        %v1579 = vpop.f32.mrf.mxu0
        %v1580 = vadd.f32 0.0, %v1579
        %v1581 = vpop.f32.mrf.mxu0
        %v1582 = vpop.f32.mrf.mxu0
        %v1583 = vadd.f32 0.0, %v1582
        %v1584 = vpop.f32.mrf.mxu0
        %1585 = vmatprep.mubr.bf16.mxu0 0
        %1586 = vmatmul.mubr.bf16.gmra.mxu0 %v1456
        %v1587 = vpop.f32.mrf.mxu0
        %v1588 = vadd.f32 0.0, %v1587
        %v1589 = vpop.f32.mrf.mxu0
        %v1590 = vpop.f32.mrf.mxu0
        %v1591 = vadd.f32 0.0, %v1590
        %v1592 = vpop.f32.mrf.mxu0
        %1593 = vmatprep.mubr.bf16.mxu0 0
        %1594 = vmatmul.mubr.bf16.gmra.mxu0 %v1459
        %v1595 = vpop.f32.mrf.mxu0
        %v1596 = vadd.f32 0.0, %v1595
        %v1597 = vpop.f32.mrf.mxu0
        %v1598 = vpop.f32.mrf.mxu0
        %v1599 = vadd.f32 0.0, %v1598
        %v1600 = vpop.f32.mrf.mxu0
        %1601 = vmatprep.mubr.bf16.mxu0 0
        %1602 = vmatmul.mubr.bf16.gmra.mxu0 %v1462
        %v1603 = vpop.f32.mrf.mxu0
        %v1604 = vadd.f32 0.0, %v1603
        %v1605 = vpop.f32.mrf.mxu0
        %v1606 = vpop.f32.mrf.mxu0
        %v1607 = vadd.f32 0.0, %v1606
        %v1608 = vpop.f32.mrf.mxu0
        %1609 = vmatprep.mubr.bf16.mxu0 0
        %1610 = vmatmul.mubr.bf16.gmra.mxu0 %v1465
        %v1611 = vpop.f32.mrf.mxu0
        %v1612 = vadd.f32 0.0, %v1611
        %v1613 = vpop.f32.mrf.mxu0
        %v1614 = vpop.f32.mrf.mxu0
        %v1615 = vadd.f32 0.0, %v1614
        %v1616 = vpop.f32.mrf.mxu0
        %1617 = vmatprep.mubr.bf16.mxu0 0
        %1618 = vmatmul.mubr.bf16.gmra.mxu0 %v1468
        %v1619 = vpop.f32.mrf.mxu0
        %v1620 = vadd.f32 0.0, %v1619
        %v1621 = vpop.f32.mrf.mxu0
        %v1622 = vpop.f32.mrf.mxu0
        %v1623 = vadd.f32 0.0, %v1622
        %v1624 = vpop.f32.mrf.mxu0
        %1625 = vmatprep.mubr.bf16.mxu0 0
        %1626 = vmatmul.mubr.bf16.gmra.mxu0 %v1471
        %v1627 = vpop.f32.mrf.mxu0
        %v1628 = vadd.f32 0.0, %v1627
        %v1629 = vpop.f32.mrf.mxu0
        %v1630 = vpop.f32.mrf.mxu0
        %v1631 = vadd.f32 0.0, %v1630
        %v1632 = vpop.f32.mrf.mxu0
        %1633 = vdwg.mxu0
        %v1634 = vadd.f32 %v1177, %v1508
        %v1635 = vadd.f32 %v1180, %v1511
        %v1636 = vadd.f32 %v1185, %v1516
        %v1637 = vadd.f32 %v1188, %v1519
        %v1638 = vadd.f32 %v1193, %v1524
        %v1639 = vadd.f32 %v1196, %v1527
        %v1640 = vadd.f32 %v1201, %v1532
        %v1641 = vadd.f32 %v1204, %v1535
        %v1642 = vadd.f32 %v1209, %v1540
        %v1643 = vadd.f32 %v1212, %v1543
        %v1644 = vadd.f32 %v1217, %v1548
        %v1645 = vadd.f32 %v1220, %v1551
        %v1646 = vadd.f32 %v1225, %v1556
        %v1647 = vadd.f32 %v1228, %v1559
        %v1648 = vadd.f32 %v1233, %v1564
        %v1649 = vadd.f32 %v1236, %v1567
        %v1650 = vadd.f32 %v1241, %v1572
        %v1651 = vadd.f32 %v1244, %v1575
        %v1652 = vadd.f32 %v1249, %v1580
        %v1653 = vadd.f32 %v1252, %v1583
        %v1654 = vadd.f32 %v1257, %v1588
        %v1655 = vadd.f32 %v1260, %v1591
        %v1656 = vadd.f32 %v1265, %v1596
        %v1657 = vadd.f32 %v1268, %v1599
        %v1658 = vadd.f32 %v1273, %v1604
        %v1659 = vadd.f32 %v1276, %v1607
        %v1660 = vadd.f32 %v1281, %v1612
        %v1661 = vadd.f32 %v1284, %v1615
        %v1662 = vadd.f32 %v1289, %v1620
        %v1663 = vadd.f32 %v1292, %v1623
        %v1664 = vadd.f32 %v1297, %v1628
        %v1665 = vadd.f32 %v1300, %v1631
        %v1667 = vrot.slane %v1665, 7
        %vm1700 = vcmask 1040384
        %v1701 = vrot.slane %v1634, 7
        %v1702 = vrot.slane %v1635, 7
        %v1703 = vsel %vm1700, %v1701, %v1702
        %v1704 = vrot.slane %v1636, 7
        %v1705 = vsel %vm1700, %v1702, %v1704
        %v1706 = vrot.slane %v1637, 7
        %v1707 = vsel %vm1700, %v1704, %v1706
        %v1708 = vrot.slane %v1638, 7
        %v1709 = vsel %vm1700, %v1706, %v1708
        %v1710 = vrot.slane %v1639, 7
        %v1711 = vsel %vm1700, %v1708, %v1710
        %v1712 = vrot.slane %v1640, 7
        %v1713 = vsel %vm1700, %v1710, %v1712
        %v1714 = vrot.slane %v1641, 7
        %v1715 = vsel %vm1700, %v1712, %v1714
        %v1716 = vrot.slane %v1642, 7
        %v1717 = vsel %vm1700, %v1714, %v1716
        %v1718 = vrot.slane %v1643, 7
        %v1719 = vsel %vm1700, %v1716, %v1718
        %v1720 = vrot.slane %v1644, 7
        %v1721 = vsel %vm1700, %v1718, %v1720
        %v1722 = vrot.slane %v1645, 7
        %v1723 = vsel %vm1700, %v1720, %v1722
        %v1724 = vrot.slane %v1646, 7
        %v1725 = vsel %vm1700, %v1722, %v1724
        %v1726 = vrot.slane %v1647, 7
        %v1727 = vsel %vm1700, %v1724, %v1726
        %v1728 = vrot.slane %v1648, 7
        %v1729 = vsel %vm1700, %v1726, %v1728
        %v1730 = vrot.slane %v1649, 7
        %v1731 = vsel %vm1700, %v1728, %v1730
        %v1732 = vrot.slane %v1650, 7
        %v1733 = vsel %vm1700, %v1730, %v1732
        %v1734 = vrot.slane %v1651, 7
        %v1735 = vsel %vm1700, %v1732, %v1734
        %v1736 = vrot.slane %v1652, 7
        %v1737 = vsel %vm1700, %v1734, %v1736
        %v1738 = vrot.slane %v1653, 7
        %v1739 = vsel %vm1700, %v1736, %v1738
        %v1740 = vrot.slane %v1654, 7
        %v1741 = vsel %vm1700, %v1738, %v1740
        %v1742 = vrot.slane %v1655, 7
        %v1743 = vsel %vm1700, %v1740, %v1742
        %v1744 = vrot.slane %v1656, 7
        %v1745 = vsel %vm1700, %v1742, %v1744
        %v1746 = vrot.slane %v1657, 7
        %v1747 = vsel %vm1700, %v1744, %v1746
        %v1748 = vrot.slane %v1658, 7
        %v1749 = vsel %vm1700, %v1746, %v1748
        %v1750 = vrot.slane %v1659, 7
        %v1751 = vsel %vm1700, %v1748, %v1750
        %v1752 = vrot.slane %v1660, 7
        %v1753 = vsel %vm1700, %v1750, %v1752
        %v1754 = vrot.slane %v1661, 7
        %v1755 = vsel %vm1700, %v1752, %v1754
        %v1756 = vrot.slane %v1662, 7
        %v1757 = vsel %vm1700, %v1754, %v1756
        %v1758 = vrot.slane %v1663, 7
        %v1759 = vsel %vm1700, %v1756, %v1758
        %v1760 = vrot.slane %v1664, 7
        %v1761 = vsel %vm1700, %v1758, %v1760
        %v1762 = vsel %vm1700, %v1760, %v1667
        %v1795 = vsel %vm1700, %v1667, %v1701
        %vm1796 = vcmask 1046528
        %v1797 = vrot.slane %v1634, 1
        %v1798 = vrot.slane %v1635, 1
        %v1799 = vsel %vm1796, %v1797, %v1798
        %v1800 = vrot.slane %v1636, 1
        %v1801 = vsel %vm1796, %v1798, %v1800
        %v1802 = vrot.slane %v1637, 1
        %v1803 = vsel %vm1796, %v1800, %v1802
        %v1804 = vrot.slane %v1638, 1
        %v1805 = vsel %vm1796, %v1802, %v1804
        %v1806 = vrot.slane %v1639, 1
        %v1807 = vsel %vm1796, %v1804, %v1806
        %v1808 = vrot.slane %v1640, 1
        %v1809 = vsel %vm1796, %v1806, %v1808
        %v1810 = vrot.slane %v1641, 1
        %v1811 = vsel %vm1796, %v1808, %v1810
        %v1812 = vrot.slane %v1642, 1
        %v1813 = vsel %vm1796, %v1810, %v1812
        %v1814 = vrot.slane %v1643, 1
        %v1815 = vsel %vm1796, %v1812, %v1814
        %v1816 = vrot.slane %v1644, 1
        %v1817 = vsel %vm1796, %v1814, %v1816
        %v1818 = vrot.slane %v1645, 1
        %v1819 = vsel %vm1796, %v1816, %v1818
        %v1820 = vrot.slane %v1646, 1
        %v1821 = vsel %vm1796, %v1818, %v1820
        %v1822 = vrot.slane %v1647, 1
        %v1823 = vsel %vm1796, %v1820, %v1822
        %v1824 = vrot.slane %v1648, 1
        %v1825 = vsel %vm1796, %v1822, %v1824
        %v1826 = vrot.slane %v1649, 1
        %v1827 = vsel %vm1796, %v1824, %v1826
        %v1828 = vrot.slane %v1650, 1
        %v1829 = vsel %vm1796, %v1826, %v1828
        %v1830 = vrot.slane %v1651, 1
        %v1831 = vsel %vm1796, %v1828, %v1830
        %v1832 = vrot.slane %v1652, 1
        %v1833 = vsel %vm1796, %v1830, %v1832
        %v1834 = vrot.slane %v1653, 1
        %v1835 = vsel %vm1796, %v1832, %v1834
        %v1836 = vrot.slane %v1654, 1
        %v1837 = vsel %vm1796, %v1834, %v1836
        %v1838 = vrot.slane %v1655, 1
        %v1839 = vsel %vm1796, %v1836, %v1838
        %v1840 = vrot.slane %v1656, 1
        %v1841 = vsel %vm1796, %v1838, %v1840
        %v1842 = vrot.slane %v1657, 1
        %v1843 = vsel %vm1796, %v1840, %v1842
        %v1844 = vrot.slane %v1658, 1
        %v1845 = vsel %vm1796, %v1842, %v1844
        %v1846 = vrot.slane %v1659, 1
        %v1847 = vsel %vm1796, %v1844, %v1846
        %v1848 = vrot.slane %v1660, 1
        %v1849 = vsel %vm1796, %v1846, %v1848
        %v1850 = vrot.slane %v1661, 1
        %v1851 = vsel %vm1796, %v1848, %v1850
        %v1852 = vrot.slane %v1662, 1
        %v1853 = vsel %vm1796, %v1850, %v1852
        %v1854 = vrot.slane %v1663, 1
        %v1855 = vsel %vm1796, %v1852, %v1854
        %v1856 = vrot.slane %v1664, 1
        %v1857 = vsel %vm1796, %v1854, %v1856
        %v1858 = vrot.slane %v1665, 1
        %v1859 = vsel %vm1796, %v1856, %v1858
        %v1862 = vsel %vm1796, %v1858, %v1797
        %1863 = vrot.lane.b32.xlu0 %v1634, 124
        %v1864 = vpop.permute.xlu0 %1863
        %1865 = vrot.lane.b32.xlu0 %v1635, 124
        %v1866 = vpop.permute.xlu0 %1865
        %1867 = vrot.lane.b32.xlu0 %v1636, 124
        %v1868 = vpop.permute.xlu0 %1867
        %1869 = vrot.lane.b32.xlu0 %v1637, 124
        %v1870 = vpop.permute.xlu0 %1869
        %1871 = vrot.lane.b32.xlu0 %v1638, 124
        %v1872 = vpop.permute.xlu0 %1871
        %1873 = vrot.lane.b32.xlu0 %v1639, 124
        %v1874 = vpop.permute.xlu0 %1873
        %1875 = vrot.lane.b32.xlu0 %v1640, 124
        %v1876 = vpop.permute.xlu0 %1875
        %1877 = vrot.lane.b32.xlu0 %v1641, 124
        %v1878 = vpop.permute.xlu0 %1877
        %1879 = vrot.lane.b32.xlu0 %v1642, 124
        %v1880 = vpop.permute.xlu0 %1879
        %1881 = vrot.lane.b32.xlu0 %v1643, 124
        %v1882 = vpop.permute.xlu0 %1881
        %1883 = vrot.lane.b32.xlu0 %v1644, 124
        %v1884 = vpop.permute.xlu0 %1883
        %1885 = vrot.lane.b32.xlu0 %v1645, 124
        %v1886 = vpop.permute.xlu0 %1885
        %1887 = vrot.lane.b32.xlu0 %v1646, 124
        %v1888 = vpop.permute.xlu0 %1887
        %1889 = vrot.lane.b32.xlu0 %v1647, 124
        %v1890 = vpop.permute.xlu0 %1889
        %1891 = vrot.lane.b32.xlu0 %v1648, 124
        %v1892 = vpop.permute.xlu0 %1891
        %1893 = vrot.lane.b32.xlu0 %v1649, 124
        %v1894 = vpop.permute.xlu0 %1893
        %1895 = vrot.lane.b32.xlu0 %v1650, 124
        %v1896 = vpop.permute.xlu0 %1895
        %1897 = vrot.lane.b32.xlu0 %v1651, 124
        %v1898 = vpop.permute.xlu0 %1897
        %1899 = vrot.lane.b32.xlu0 %v1652, 124
        %v1900 = vpop.permute.xlu0 %1899
        %1901 = vrot.lane.b32.xlu0 %v1653, 124
        %v1902 = vpop.permute.xlu0 %1901
        %1903 = vrot.lane.b32.xlu0 %v1654, 124
        %v1904 = vpop.permute.xlu0 %1903
        %1905 = vrot.lane.b32.xlu0 %v1655, 124
        %v1906 = vpop.permute.xlu0 %1905
        %1907 = vrot.lane.b32.xlu0 %v1656, 124
        %v1908 = vpop.permute.xlu0 %1907
        %1909 = vrot.lane.b32.xlu0 %v1657, 124
        %v1910 = vpop.permute.xlu0 %1909
        %1911 = vrot.lane.b32.xlu0 %v1658, 124
        %v1912 = vpop.permute.xlu0 %1911
        %1913 = vrot.lane.b32.xlu0 %v1659, 124
        %v1914 = vpop.permute.xlu0 %1913
        %1915 = vrot.lane.b32.xlu0 %v1660, 124
        %v1916 = vpop.permute.xlu0 %1915
        %1917 = vrot.lane.b32.xlu0 %v1661, 124
        %v1918 = vpop.permute.xlu0 %1917
        %1919 = vrot.lane.b32.xlu0 %v1662, 124
        %v1920 = vpop.permute.xlu0 %1919
        %1921 = vrot.lane.b32.xlu0 %v1663, 124
        %v1922 = vpop.permute.xlu0 %1921
        %1923 = vrot.lane.b32.xlu0 %v1664, 124
        %v1924 = vpop.permute.xlu0 %1923
        %1925 = vrot.lane.b32.xlu0 %v1665, 124
        %v1926 = vpop.permute.xlu0 %1925
        %v1959 = vadd.f32 %v1795, %v1864
        %v1960 = vadd.f32 %v1703, %v1866
        %v1961 = vadd.f32 %v1705, %v1868
        %v1962 = vadd.f32 %v1707, %v1870
        %v1963 = vadd.f32 %v1709, %v1872
        %v1964 = vadd.f32 %v1711, %v1874
        %v1965 = vadd.f32 %v1713, %v1876
        %v1966 = vadd.f32 %v1715, %v1878
        %v1967 = vadd.f32 %v1717, %v1880
        %v1968 = vadd.f32 %v1719, %v1882
        %v1969 = vadd.f32 %v1721, %v1884
        %v1970 = vadd.f32 %v1723, %v1886
        %v1971 = vadd.f32 %v1725, %v1888
        %v1972 = vadd.f32 %v1727, %v1890
        %v1973 = vadd.f32 %v1729, %v1892
        %v1974 = vadd.f32 %v1731, %v1894
        %v1975 = vadd.f32 %v1733, %v1896
        %v1976 = vadd.f32 %v1735, %v1898
        %v1977 = vadd.f32 %v1737, %v1900
        %v1978 = vadd.f32 %v1739, %v1902
        %v1979 = vadd.f32 %v1741, %v1904
        %v1980 = vadd.f32 %v1743, %v1906
        %v1981 = vadd.f32 %v1745, %v1908
        %v1982 = vadd.f32 %v1747, %v1910
        %v1983 = vadd.f32 %v1749, %v1912
        %v1984 = vadd.f32 %v1751, %v1914
        %v1985 = vadd.f32 %v1753, %v1916
        %v1986 = vadd.f32 %v1755, %v1918
        %v1987 = vadd.f32 %v1757, %v1920
        %v1988 = vadd.f32 %v1759, %v1922
        %v1989 = vadd.f32 %v1761, %v1924
        %v1990 = vadd.f32 %v1762, %v1926
        %1992 = vrot.lane.b32.xlu0 %v1799, 120
        %v1993 = vpop.permute.xlu0 %1992
        %1994 = vrot.lane.b32.xlu0 %v1801, 120
        %v1995 = vpop.permute.xlu0 %1994
        %1996 = vrot.lane.b32.xlu0 %v1803, 120
        %v1997 = vpop.permute.xlu0 %1996
        %1998 = vrot.lane.b32.xlu0 %v1805, 120
        %v1999 = vpop.permute.xlu0 %1998
        %2000 = vrot.lane.b32.xlu0 %v1807, 120
        %v2001 = vpop.permute.xlu0 %2000
        %2002 = vrot.lane.b32.xlu0 %v1809, 120
        %v2003 = vpop.permute.xlu0 %2002
        %2004 = vrot.lane.b32.xlu0 %v1811, 120
        %v2005 = vpop.permute.xlu0 %2004
        %2006 = vrot.lane.b32.xlu0 %v1813, 120
        %v2007 = vpop.permute.xlu0 %2006
        %2008 = vrot.lane.b32.xlu0 %v1815, 120
        %v2009 = vpop.permute.xlu0 %2008
        %2010 = vrot.lane.b32.xlu0 %v1817, 120
        %v2011 = vpop.permute.xlu0 %2010
        %2012 = vrot.lane.b32.xlu0 %v1819, 120
        %v2013 = vpop.permute.xlu0 %2012
        %2014 = vrot.lane.b32.xlu0 %v1821, 120
        %v2015 = vpop.permute.xlu0 %2014
        %2016 = vrot.lane.b32.xlu0 %v1823, 120
        %v2017 = vpop.permute.xlu0 %2016
        %2018 = vrot.lane.b32.xlu0 %v1825, 120
        %v2019 = vpop.permute.xlu0 %2018
        %2020 = vrot.lane.b32.xlu0 %v1827, 120
        %v2021 = vpop.permute.xlu0 %2020
        %2022 = vrot.lane.b32.xlu0 %v1829, 120
        %v2023 = vpop.permute.xlu0 %2022
        %2024 = vrot.lane.b32.xlu0 %v1831, 120
        %v2025 = vpop.permute.xlu0 %2024
        %2026 = vrot.lane.b32.xlu0 %v1833, 120
        %v2027 = vpop.permute.xlu0 %2026
        %2028 = vrot.lane.b32.xlu0 %v1835, 120
        %v2029 = vpop.permute.xlu0 %2028
        %2030 = vrot.lane.b32.xlu0 %v1837, 120
        %v2031 = vpop.permute.xlu0 %2030
        %2032 = vrot.lane.b32.xlu0 %v1839, 120
        %v2033 = vpop.permute.xlu0 %2032
        %2034 = vrot.lane.b32.xlu0 %v1841, 120
        %v2035 = vpop.permute.xlu0 %2034
        %2036 = vrot.lane.b32.xlu0 %v1843, 120
        %v2037 = vpop.permute.xlu0 %2036
        %2038 = vrot.lane.b32.xlu0 %v1845, 120
        %v2039 = vpop.permute.xlu0 %2038
        %2040 = vrot.lane.b32.xlu0 %v1847, 120
        %v2041 = vpop.permute.xlu0 %2040
        %2042 = vrot.lane.b32.xlu0 %v1849, 120
        %v2043 = vpop.permute.xlu0 %2042
        %2044 = vrot.lane.b32.xlu0 %v1851, 120
        %v2045 = vpop.permute.xlu0 %2044
        %2046 = vrot.lane.b32.xlu0 %v1853, 120
        %v2047 = vpop.permute.xlu0 %2046
        %2048 = vrot.lane.b32.xlu0 %v1855, 120
        %v2049 = vpop.permute.xlu0 %2048
        %2050 = vrot.lane.b32.xlu0 %v1857, 120
        %v2051 = vpop.permute.xlu0 %2050
        %2052 = vrot.lane.b32.xlu0 %v1859, 120
        %v2053 = vpop.permute.xlu0 %2052
        %2054 = vrot.lane.b32.xlu0 %v1862, 120
        %v2055 = vpop.permute.xlu0 %2054
        %v2088 = vadd.f32 %v1959, %v1993
        %v2089 = vadd.f32 %v1960, %v1995
        %v2090 = vadd.f32 %v1961, %v1997
        %v2091 = vadd.f32 %v1962, %v1999
        %v2092 = vadd.f32 %v1963, %v2001
        %v2093 = vadd.f32 %v1964, %v2003
        %v2094 = vadd.f32 %v1965, %v2005
        %v2095 = vadd.f32 %v1966, %v2007
        %v2096 = vadd.f32 %v1967, %v2009
        %v2097 = vadd.f32 %v1968, %v2011
        %v2098 = vadd.f32 %v1969, %v2013
        %v2099 = vadd.f32 %v1970, %v2015
        %v2100 = vadd.f32 %v1971, %v2017
        %v2101 = vadd.f32 %v1972, %v2019
        %v2102 = vadd.f32 %v1973, %v2021
        %v2103 = vadd.f32 %v1974, %v2023
        %v2104 = vadd.f32 %v1975, %v2025
        %v2105 = vadd.f32 %v1976, %v2027
        %v2106 = vadd.f32 %v1977, %v2029
        %v2107 = vadd.f32 %v1978, %v2031
        %v2108 = vadd.f32 %v1979, %v2033
        %v2109 = vadd.f32 %v1980, %v2035
        %v2110 = vadd.f32 %v1981, %v2037
        %v2111 = vadd.f32 %v1982, %v2039
        %v2112 = vadd.f32 %v1983, %v2041
        %v2113 = vadd.f32 %v1984, %v2043
        %v2114 = vadd.f32 %v1985, %v2045
        %v2115 = vadd.f32 %v1986, %v2047
        %v2116 = vadd.f32 %v1987, %v2049
        %v2117 = vadd.f32 %v1988, %v2051
        %v2118 = vadd.f32 %v1989, %v2053
        %v2119 = vadd.f32 %v1990, %v2055
        %v2120 = vld [vmem:[%s4] sm:$0x1]
        %v2122 = vlaneseq
        %v2123 = vshrl.u32 %v2122, 7
        %v2124 = vsub.s32 0, %v2123
        %v2125 = vrot.slane %v2120, %v2124
        %v2127 = vmul.f32 %v2088, %v2125
        %v2128 = vmul.f32 %v2089, %v2125
        %v2129 = vmul.f32 %v2090, %v2125
        %v2130 = vmul.f32 %v2091, %v2125
        %v2131 = vmul.f32 %v2092, %v2125
        %v2132 = vmul.f32 %v2093, %v2125
        %v2133 = vmul.f32 %v2094, %v2125
        %v2134 = vmul.f32 %v2095, %v2125
        %v2135 = vmul.f32 %v2096, %v2125
        %v2136 = vmul.f32 %v2097, %v2125
        %v2137 = vmul.f32 %v2098, %v2125
        %v2138 = vmul.f32 %v2099, %v2125
        %v2139 = vmul.f32 %v2100, %v2125
        %v2140 = vmul.f32 %v2101, %v2125
        %v2141 = vmul.f32 %v2102, %v2125
        %v2142 = vmul.f32 %v2103, %v2125
        %v2143 = vmul.f32 %v2104, %v2125
        %v2144 = vmul.f32 %v2105, %v2125
        %v2145 = vmul.f32 %v2106, %v2125
        %v2146 = vmul.f32 %v2107, %v2125
        %v2147 = vmul.f32 %v2108, %v2125
        %v2148 = vmul.f32 %v2109, %v2125
        %v2149 = vmul.f32 %v2110, %v2125
        %v2150 = vmul.f32 %v2111, %v2125
        %v2151 = vmul.f32 %v2112, %v2125
        %v2152 = vmul.f32 %v2113, %v2125
        %v2153 = vmul.f32 %v2114, %v2125
        %v2154 = vmul.f32 %v2115, %v2125
        %v2155 = vmul.f32 %v2116, %v2125
        %v2156 = vmul.f32 %v2117, %v2125
        %v2157 = vmul.f32 %v2118, %v2125
        %v2158 = vmul.f32 %v2119, %v2125
        %v2159 = vld [vmem:[%s5] sm:$0x1]
        %v2161 = vlaneseq
        %v2162 = vshrl.u32 %v2161, 7
        %v2163 = vsub.s32 0, %v2162
        %v2164 = vrot.slane %v2159, %v2163
        %v2166 = vadd.f32 %v2127, %v2164
        %v2167 = vadd.f32 %v2128, %v2164
        %v2168 = vadd.f32 %v2129, %v2164
        %v2169 = vadd.f32 %v2130, %v2164
        %v2170 = vadd.f32 %v2131, %v2164
        %v2171 = vadd.f32 %v2132, %v2164
        %v2172 = vadd.f32 %v2133, %v2164
        %v2173 = vadd.f32 %v2134, %v2164
        %v2174 = vadd.f32 %v2135, %v2164
        %v2175 = vadd.f32 %v2136, %v2164
        %v2176 = vadd.f32 %v2137, %v2164
        %v2177 = vadd.f32 %v2138, %v2164
        %v2178 = vadd.f32 %v2139, %v2164
        %v2179 = vadd.f32 %v2140, %v2164
        %v2180 = vadd.f32 %v2141, %v2164
        %v2181 = vadd.f32 %v2142, %v2164
        %v2182 = vadd.f32 %v2143, %v2164
        %v2183 = vadd.f32 %v2144, %v2164
        %v2184 = vadd.f32 %v2145, %v2164
        %v2185 = vadd.f32 %v2146, %v2164
        %v2186 = vadd.f32 %v2147, %v2164
        %v2187 = vadd.f32 %v2148, %v2164
        %v2188 = vadd.f32 %v2149, %v2164
        %v2189 = vadd.f32 %v2150, %v2164
        %v2190 = vadd.f32 %v2151, %v2164
        %v2191 = vadd.f32 %v2152, %v2164
        %v2192 = vadd.f32 %v2153, %v2164
        %v2193 = vadd.f32 %v2154, %v2164
        %v2194 = vadd.f32 %v2155, %v2164
        %v2195 = vadd.f32 %v2156, %v2164
        %v2196 = vadd.f32 %v2157, %v2164
        %v2197 = vadd.f32 %v2158, %v2164
        %v2198 = vmax.f32 %v2166, 0.0
        %v2199 = vmax.f32 %v2167, 0.0
        %v2200 = vmax.f32 %v2168, 0.0
        %v2201 = vmax.f32 %v2169, 0.0
        %v2202 = vmax.f32 %v2170, 0.0
        %v2203 = vmax.f32 %v2171, 0.0
        %v2204 = vmax.f32 %v2172, 0.0
        %v2205 = vmax.f32 %v2173, 0.0
        %v2206 = vmax.f32 %v2174, 0.0
        %v2207 = vmax.f32 %v2175, 0.0
        %v2208 = vmax.f32 %v2176, 0.0
        %v2209 = vmax.f32 %v2177, 0.0
        %v2210 = vmax.f32 %v2178, 0.0
        %v2211 = vmax.f32 %v2179, 0.0
        %v2212 = vmax.f32 %v2180, 0.0
        %v2213 = vmax.f32 %v2181, 0.0
        %v2214 = vmax.f32 %v2182, 0.0
        %v2215 = vmax.f32 %v2183, 0.0
        %v2216 = vmax.f32 %v2184, 0.0
        %v2217 = vmax.f32 %v2185, 0.0
        %v2218 = vmax.f32 %v2186, 0.0
        %v2219 = vmax.f32 %v2187, 0.0
        %v2220 = vmax.f32 %v2188, 0.0
        %v2221 = vmax.f32 %v2189, 0.0
        %v2222 = vmax.f32 %v2190, 0.0
        %v2223 = vmax.f32 %v2191, 0.0
        %v2224 = vmax.f32 %v2192, 0.0
        %v2225 = vmax.f32 %v2193, 0.0
        %v2226 = vmax.f32 %v2194, 0.0
        %v2227 = vmax.f32 %v2195, 0.0
        %v2228 = vmax.f32 %v2196, 0.0
        %v2229 = vmax.f32 %v2197, 0.0
        %v2230 = vpack.c.bf16 %v2199, %v2198
        %v2231 = vpack.c.bf16 %v2201, %v2200
        %v2232 = vpack.c.bf16 %v2203, %v2202
        %v2233 = vpack.c.bf16 %v2205, %v2204
        %v2234 = vpack.c.bf16 %v2207, %v2206
        %v2235 = vpack.c.bf16 %v2209, %v2208
        %v2236 = vpack.c.bf16 %v2211, %v2210
        %v2237 = vpack.c.bf16 %v2213, %v2212
        %v2238 = vpack.c.bf16 %v2215, %v2214
        %v2239 = vpack.c.bf16 %v2217, %v2216
        %v2240 = vpack.c.bf16 %v2219, %v2218
        %v2241 = vpack.c.bf16 %v2221, %v2220
        %v2242 = vpack.c.bf16 %v2223, %v2222
        %v2243 = vpack.c.bf16 %v2225, %v2224
        %v2244 = vpack.c.bf16 %v2227, %v2226
        %v2245 = vpack.c.bf16 %v2229, %v2228
        %v2246 = vld [vmem:[%s6] sm:$0x3]
        %vm2247 = vcmask 31744
        %v2249 = vsel %vm2247, %v2230, 0
        %v2252 = vsel %vm2247, %v2231, 0
        %v2255 = vsel %vm2247, %v2232, 0
        %v2258 = vsel %vm2247, %v2233, 0
        %v2261 = vsel %vm2247, %v2234, 0
        %v2264 = vsel %vm2247, %v2235, 0
        %v2267 = vsel %vm2247, %v2236, 0
        %v2270 = vsel %vm2247, %v2237, 0
        %v2273 = vsel %vm2247, %v2238, 0
        %v2276 = vsel %vm2247, %v2239, 0
        %v2279 = vsel %vm2247, %v2240, 0
        %v2282 = vsel %vm2247, %v2241, 0
        %v2285 = vsel %vm2247, %v2242, 0
        %v2288 = vsel %vm2247, %v2243, 0
        %v2291 = vsel %vm2247, %v2244, 0
        %v2294 = vsel %vm2247, %v2245, 0
        %vm2296 = vcmask 1041408
        %v2298 = vsel %vm2296, %v2246, 0
        %2300 = vmatprep.subr.bf16.mxu0 0
        %2301 = vmatpush1.bf16.msra.mxu0 0
        %2302 = vmatprep.subr.bf16.mxu0 0
        %2303 = vmatpush1.bf16.msra.mxu0 0
        %2304 = vmatprep.subr.bf16.mxu0 0
        %2305 = vmatpush1.bf16.msra.mxu0 0
        %2306 = vmatprep.subr.bf16.mxu0 0
        %2307 = vmatpush1.bf16.msra.mxu0 0
        %2308 = vmatprep.subr.bf16.mxu0 0
        %2309 = vmatpush1.bf16.msra.mxu0 0
        %2310 = vmatprep.subr.bf16.mxu0 0
        %2311 = vmatpush1.bf16.msra.mxu0 0
        %2312 = vmatprep.subr.bf16.mxu0 0
        %2313 = vmatpush1.bf16.msra.mxu0 0
        %2314 = vmatprep.subr.bf16.mxu0 0
        %2315 = vmatpush1.bf16.msra.mxu0 %v2298
        %2316 = vmatprep.subr.bf16.mxu0 0
        %2317 = vmatpush2.bf16.msra.mxu0 0
        %2318 = vmatprep.subr.bf16.mxu0 0
        %2319 = vmatpush2.bf16.msra.mxu0 0
        %2320 = vmatprep.subr.bf16.mxu0 0
        %2321 = vmatpush2.bf16.msra.mxu0 0
        %2322 = vmatprep.subr.bf16.mxu0 0
        %2323 = vmatpush2.bf16.msra.mxu0 0
        %2324 = vmatprep.subr.bf16.mxu0 0
        %2325 = vmatpush2.bf16.msra.mxu0 0
        %2326 = vmatprep.subr.bf16.mxu0 0
        %2327 = vmatpush2.bf16.msra.mxu0 0
        %2328 = vmatprep.subr.bf16.mxu0 0
        %2329 = vmatpush2.bf16.msra.mxu0 0
        %2330 = vmatprep.subr.bf16.mxu0 0
        %2331 = vmatpush2.bf16.msra.mxu0 0
        %2332 = vmatprep.mubr.bf16.mxu0 0
        %2333 = vmatmul.mubr.bf16.gmra.mxu0 %v2249
        %v2334 = vpop.f32.mrf.mxu0
        %v2335 = vadd.f32 0.0, %v2334
        %v2336 = vpop.f32.mrf.mxu0
        %v2337 = vpop.f32.mrf.mxu0
        %v2338 = vadd.f32 0.0, %v2337
        %v2339 = vpop.f32.mrf.mxu0
        %2340 = vmatprep.mubr.bf16.mxu0 0
        %2341 = vmatmul.mubr.bf16.gmra.mxu0 %v2252
        %v2342 = vpop.f32.mrf.mxu0
        %v2343 = vadd.f32 0.0, %v2342
        %v2344 = vpop.f32.mrf.mxu0
        %v2345 = vpop.f32.mrf.mxu0
        %v2346 = vadd.f32 0.0, %v2345
        %v2347 = vpop.f32.mrf.mxu0
        %2348 = vmatprep.mubr.bf16.mxu0 0
        %2349 = vmatmul.mubr.bf16.gmra.mxu0 %v2255
        %v2350 = vpop.f32.mrf.mxu0
        %v2351 = vadd.f32 0.0, %v2350
        %v2352 = vpop.f32.mrf.mxu0
        %v2353 = vpop.f32.mrf.mxu0
        %v2354 = vadd.f32 0.0, %v2353
        %v2355 = vpop.f32.mrf.mxu0
        %2356 = vmatprep.mubr.bf16.mxu0 0
        %2357 = vmatmul.mubr.bf16.gmra.mxu0 %v2258
        %v2358 = vpop.f32.mrf.mxu0
        %v2359 = vadd.f32 0.0, %v2358
        %v2360 = vpop.f32.mrf.mxu0
        %v2361 = vpop.f32.mrf.mxu0
        %v2362 = vadd.f32 0.0, %v2361
        %v2363 = vpop.f32.mrf.mxu0
        %2364 = vmatprep.mubr.bf16.mxu0 0
        %2365 = vmatmul.mubr.bf16.gmra.mxu0 %v2261
        %v2366 = vpop.f32.mrf.mxu0
        %v2367 = vadd.f32 0.0, %v2366
        %v2368 = vpop.f32.mrf.mxu0
        %v2369 = vpop.f32.mrf.mxu0
        %v2370 = vadd.f32 0.0, %v2369
        %v2371 = vpop.f32.mrf.mxu0
        %2372 = vmatprep.mubr.bf16.mxu0 0
        %2373 = vmatmul.mubr.bf16.gmra.mxu0 %v2264
        %v2374 = vpop.f32.mrf.mxu0
        %v2375 = vadd.f32 0.0, %v2374
        %v2376 = vpop.f32.mrf.mxu0
        %v2377 = vpop.f32.mrf.mxu0
        %v2378 = vadd.f32 0.0, %v2377
        %v2379 = vpop.f32.mrf.mxu0
        %2380 = vmatprep.mubr.bf16.mxu0 0
        %2381 = vmatmul.mubr.bf16.gmra.mxu0 %v2267
        %v2382 = vpop.f32.mrf.mxu0
        %v2383 = vadd.f32 0.0, %v2382
        %v2384 = vpop.f32.mrf.mxu0
        %v2385 = vpop.f32.mrf.mxu0
        %v2386 = vadd.f32 0.0, %v2385
        %v2387 = vpop.f32.mrf.mxu0
        %2388 = vmatprep.mubr.bf16.mxu0 0
        %2389 = vmatmul.mubr.bf16.gmra.mxu0 %v2270
        %v2390 = vpop.f32.mrf.mxu0
        %v2391 = vadd.f32 0.0, %v2390
        %v2392 = vpop.f32.mrf.mxu0
        %v2393 = vpop.f32.mrf.mxu0
        %v2394 = vadd.f32 0.0, %v2393
        %v2395 = vpop.f32.mrf.mxu0
        %2396 = vmatprep.mubr.bf16.mxu0 0
        %2397 = vmatmul.mubr.bf16.gmra.mxu0 %v2273
        %v2398 = vpop.f32.mrf.mxu0
        %v2399 = vadd.f32 0.0, %v2398
        %v2400 = vpop.f32.mrf.mxu0
        %v2401 = vpop.f32.mrf.mxu0
        %v2402 = vadd.f32 0.0, %v2401
        %v2403 = vpop.f32.mrf.mxu0
        %2404 = vmatprep.mubr.bf16.mxu0 0
        %2405 = vmatmul.mubr.bf16.gmra.mxu0 %v2276
        %v2406 = vpop.f32.mrf.mxu0
        %v2407 = vadd.f32 0.0, %v2406
        %v2408 = vpop.f32.mrf.mxu0
        %v2409 = vpop.f32.mrf.mxu0
        %v2410 = vadd.f32 0.0, %v2409
        %v2411 = vpop.f32.mrf.mxu0
        %2412 = vmatprep.mubr.bf16.mxu0 0
        %2413 = vmatmul.mubr.bf16.gmra.mxu0 %v2279
        %v2414 = vpop.f32.mrf.mxu0
        %v2415 = vadd.f32 0.0, %v2414
        %v2416 = vpop.f32.mrf.mxu0
        %v2417 = vpop.f32.mrf.mxu0
        %v2418 = vadd.f32 0.0, %v2417
        %v2419 = vpop.f32.mrf.mxu0
        %2420 = vmatprep.mubr.bf16.mxu0 0
        %2421 = vmatmul.mubr.bf16.gmra.mxu0 %v2282
        %v2422 = vpop.f32.mrf.mxu0
        %v2423 = vadd.f32 0.0, %v2422
        %v2424 = vpop.f32.mrf.mxu0
        %v2425 = vpop.f32.mrf.mxu0
        %v2426 = vadd.f32 0.0, %v2425
        %v2427 = vpop.f32.mrf.mxu0
        %2428 = vmatprep.mubr.bf16.mxu0 0
        %2429 = vmatmul.mubr.bf16.gmra.mxu0 %v2285
        %v2430 = vpop.f32.mrf.mxu0
        %v2431 = vadd.f32 0.0, %v2430
        %v2432 = vpop.f32.mrf.mxu0
        %v2433 = vpop.f32.mrf.mxu0
        %v2434 = vadd.f32 0.0, %v2433
        %v2435 = vpop.f32.mrf.mxu0
        %2436 = vmatprep.mubr.bf16.mxu0 0
        %2437 = vmatmul.mubr.bf16.gmra.mxu0 %v2288
        %v2438 = vpop.f32.mrf.mxu0
        %v2439 = vadd.f32 0.0, %v2438
        %v2440 = vpop.f32.mrf.mxu0
        %v2441 = vpop.f32.mrf.mxu0
        %v2442 = vadd.f32 0.0, %v2441
        %v2443 = vpop.f32.mrf.mxu0
        %2444 = vmatprep.mubr.bf16.mxu0 0
        %2445 = vmatmul.mubr.bf16.gmra.mxu0 %v2291
        %v2446 = vpop.f32.mrf.mxu0
        %v2447 = vadd.f32 0.0, %v2446
        %v2448 = vpop.f32.mrf.mxu0
        %v2449 = vpop.f32.mrf.mxu0
        %v2450 = vadd.f32 0.0, %v2449
        %v2451 = vpop.f32.mrf.mxu0
        %2452 = vmatprep.mubr.bf16.mxu0 0
        %2453 = vmatmul.mubr.bf16.gmra.mxu0 %v2294
        %v2454 = vpop.f32.mrf.mxu0
        %v2455 = vadd.f32 0.0, %v2454
        %v2456 = vpop.f32.mrf.mxu0
        %v2457 = vpop.f32.mrf.mxu0
        %v2458 = vadd.f32 0.0, %v2457
        %v2459 = vpop.f32.mrf.mxu0
        %2460 = vdwg.mxu0
        %v2461 = vld [vmem:[%s7] sm:$0x1]
        %v2463 = vlaneseq
        %v2464 = vshrl.u32 %v2463, 7
        %v2465 = vsub.s32 0, %v2464
        %v2466 = vrot.slane %v2461, %v2465
        %v2468 = vmul.f32 %v2335, %v2466
        %v2469 = vmul.f32 %v2338, %v2466
        %v2470 = vmul.f32 %v2343, %v2466
        %v2471 = vmul.f32 %v2346, %v2466
        %v2472 = vmul.f32 %v2351, %v2466
        %v2473 = vmul.f32 %v2354, %v2466
        %v2474 = vmul.f32 %v2359, %v2466
        %v2475 = vmul.f32 %v2362, %v2466
        %v2476 = vmul.f32 %v2367, %v2466
        %v2477 = vmul.f32 %v2370, %v2466
        %v2478 = vmul.f32 %v2375, %v2466
        %v2479 = vmul.f32 %v2378, %v2466
        %v2480 = vmul.f32 %v2383, %v2466
        %v2481 = vmul.f32 %v2386, %v2466
        %v2482 = vmul.f32 %v2391, %v2466
        %v2483 = vmul.f32 %v2394, %v2466
        %v2484 = vmul.f32 %v2399, %v2466
        %v2485 = vmul.f32 %v2402, %v2466
        %v2486 = vmul.f32 %v2407, %v2466
        %v2487 = vmul.f32 %v2410, %v2466
        %v2488 = vmul.f32 %v2415, %v2466
        %v2489 = vmul.f32 %v2418, %v2466
        %v2490 = vmul.f32 %v2423, %v2466
        %v2491 = vmul.f32 %v2426, %v2466
        %v2492 = vmul.f32 %v2431, %v2466
        %v2493 = vmul.f32 %v2434, %v2466
        %v2494 = vmul.f32 %v2439, %v2466
        %v2495 = vmul.f32 %v2442, %v2466
        %v2496 = vmul.f32 %v2447, %v2466
        %v2497 = vmul.f32 %v2450, %v2466
        %v2498 = vmul.f32 %v2455, %v2466
        %v2499 = vmul.f32 %v2458, %v2466
        %v2500 = vld [vmem:[%s8] sm:$0x1]
        %v2502 = vlaneseq
        %v2503 = vshrl.u32 %v2502, 7
        %v2504 = vsub.s32 0, %v2503
        %v2505 = vrot.slane %v2500, %v2504
        %v2507 = vadd.f32 %v2468, %v2505
        %v2508 = vadd.f32 %v2469, %v2505
        %v2509 = vadd.f32 %v2470, %v2505
        %v2510 = vadd.f32 %v2471, %v2505
        %v2511 = vadd.f32 %v2472, %v2505
        %v2512 = vadd.f32 %v2473, %v2505
        %v2513 = vadd.f32 %v2474, %v2505
        %v2514 = vadd.f32 %v2475, %v2505
        %v2515 = vadd.f32 %v2476, %v2505
        %v2516 = vadd.f32 %v2477, %v2505
        %v2517 = vadd.f32 %v2478, %v2505
        %v2518 = vadd.f32 %v2479, %v2505
        %v2519 = vadd.f32 %v2480, %v2505
        %v2520 = vadd.f32 %v2481, %v2505
        %v2521 = vadd.f32 %v2482, %v2505
        %v2522 = vadd.f32 %v2483, %v2505
        %v2523 = vadd.f32 %v2484, %v2505
        %v2524 = vadd.f32 %v2485, %v2505
        %v2525 = vadd.f32 %v2486, %v2505
        %v2526 = vadd.f32 %v2487, %v2505
        %v2527 = vadd.f32 %v2488, %v2505
        %v2528 = vadd.f32 %v2489, %v2505
        %v2529 = vadd.f32 %v2490, %v2505
        %v2530 = vadd.f32 %v2491, %v2505
        %v2531 = vadd.f32 %v2492, %v2505
        %v2532 = vadd.f32 %v2493, %v2505
        %v2533 = vadd.f32 %v2494, %v2505
        %v2534 = vadd.f32 %v2495, %v2505
        %v2535 = vadd.f32 %v2496, %v2505
        %v2536 = vadd.f32 %v2497, %v2505
        %v2537 = vadd.f32 %v2498, %v2505
        %v2538 = vadd.f32 %v2499, %v2505
        %v2539 = vmax.f32 %v2507, 0.0
        %v2540 = vmax.f32 %v2508, 0.0
        %v2541 = vmax.f32 %v2509, 0.0
        %v2542 = vmax.f32 %v2510, 0.0
        %v2543 = vmax.f32 %v2511, 0.0
        %v2544 = vmax.f32 %v2512, 0.0
        %v2545 = vmax.f32 %v2513, 0.0
        %v2546 = vmax.f32 %v2514, 0.0
        %v2547 = vmax.f32 %v2515, 0.0
        %v2548 = vmax.f32 %v2516, 0.0
        %v2549 = vmax.f32 %v2517, 0.0
        %v2550 = vmax.f32 %v2518, 0.0
        %v2551 = vmax.f32 %v2519, 0.0
        %v2552 = vmax.f32 %v2520, 0.0
        %v2553 = vmax.f32 %v2521, 0.0
        %v2554 = vmax.f32 %v2522, 0.0
        %v2555 = vmax.f32 %v2523, 0.0
        %v2556 = vmax.f32 %v2524, 0.0
        %v2557 = vmax.f32 %v2525, 0.0
        %v2558 = vmax.f32 %v2526, 0.0
        %v2559 = vmax.f32 %v2527, 0.0
        %v2560 = vmax.f32 %v2528, 0.0
        %v2561 = vmax.f32 %v2529, 0.0
        %v2562 = vmax.f32 %v2530, 0.0
        %v2563 = vmax.f32 %v2531, 0.0
        %v2564 = vmax.f32 %v2532, 0.0
        %v2565 = vmax.f32 %v2533, 0.0
        %v2566 = vmax.f32 %v2534, 0.0
        %v2567 = vmax.f32 %v2535, 0.0
        %v2568 = vmax.f32 %v2536, 0.0
        %v2569 = vmax.f32 %v2537, 0.0
        %v2570 = vmax.f32 %v2538, 0.0
        %v2571 = vpack.c.bf16 %v2540, %v2539
        %v2572 = vpack.c.bf16 %v2542, %v2541
        %v2573 = vpack.c.bf16 %v2544, %v2543
        %v2574 = vpack.c.bf16 %v2546, %v2545
        %v2575 = vpack.c.bf16 %v2548, %v2547
        %v2576 = vpack.c.bf16 %v2550, %v2549
        %v2577 = vpack.c.bf16 %v2552, %v2551
        %v2578 = vpack.c.bf16 %v2554, %v2553
        %v2579 = vpack.c.bf16 %v2556, %v2555
        %v2580 = vpack.c.bf16 %v2558, %v2557
        %v2581 = vpack.c.bf16 %v2560, %v2559
        %v2582 = vpack.c.bf16 %v2562, %v2561
        %v2583 = vpack.c.bf16 %v2564, %v2563
        %v2584 = vpack.c.bf16 %v2566, %v2565
        %v2585 = vpack.c.bf16 %v2568, %v2567
        %v2586 = vpack.c.bf16 %v2570, %v2569
        %v2587 = vld [vmem:[%s9] sm:$0xf]
        %v2588 = vld [vmem:[%s9 + $0x4] sm:$0xf]
        %v2589 = vld [vmem:[%s10] sm:$0x1]
        %v2591 = vlaneseq
        %v2592 = vshrl.u32 %v2591, 7
        %v2593 = vsub.s32 0, %v2592
        %v2594 = vrot.slane %v2589, %v2593
        %v2598 = vunpack.c.l.b16 %v2587
        %v2599 = vunpack.c.l.b16 %v2588
        %v2600 = vpack.c.b16 %v2599, %v2598
        %v2603 = vsel %vm798, %v2571, 0
        %v2606 = vsel %vm798, %v2572, 0
        %v2609 = vsel %vm798, %v2573, 0
        %v2612 = vsel %vm798, %v2574, 0
        %v2615 = vsel %vm798, %v2575, 0
        %v2618 = vsel %vm798, %v2576, 0
        %v2621 = vsel %vm798, %v2577, 0
        %v2624 = vsel %vm798, %v2578, 0
        %v2627 = vsel %vm798, %v2579, 0
        %v2630 = vsel %vm798, %v2580, 0
        %v2633 = vsel %vm798, %v2581, 0
        %v2636 = vsel %vm798, %v2582, 0
        %v2639 = vsel %vm798, %v2583, 0
        %v2642 = vsel %vm798, %v2584, 0
        %v2645 = vsel %vm798, %v2585, 0
        %v2648 = vsel %vm798, %v2586, 0
        %2650 = vmatprep.subr.bf16.mxu0 0
        %2651 = vmatpush1.bf16.msra.mxu0 0
        %2652 = vmatprep.subr.bf16.mxu0 0
        %2653 = vmatpush1.bf16.msra.mxu0 0
        %2654 = vmatprep.subr.bf16.mxu0 0
        %2655 = vmatpush1.bf16.msra.mxu0 0
        %2656 = vmatprep.subr.bf16.mxu0 0
        %2657 = vmatpush1.bf16.msra.mxu0 0
        %2658 = vmatprep.subr.bf16.mxu0 0
        %2659 = vmatpush1.bf16.msra.mxu0 0
        %2660 = vmatprep.subr.bf16.mxu0 0
        %2661 = vmatpush1.bf16.msra.mxu0 0
        %2662 = vmatprep.subr.bf16.mxu0 0
        %2663 = vmatpush1.bf16.msra.mxu0 0
        %2664 = vmatprep.subr.bf16.mxu0 0
        %2665 = vmatpush1.bf16.msra.mxu0 %v2600
        %2666 = vmatprep.subr.bf16.mxu0 0
        %2667 = vmatpush2.bf16.msra.mxu0 0
        %2668 = vmatprep.subr.bf16.mxu0 0
        %2669 = vmatpush2.bf16.msra.mxu0 0
        %2670 = vmatprep.subr.bf16.mxu0 0
        %2671 = vmatpush2.bf16.msra.mxu0 0
        %2672 = vmatprep.subr.bf16.mxu0 0
        %2673 = vmatpush2.bf16.msra.mxu0 0
        %2674 = vmatprep.subr.bf16.mxu0 0
        %2675 = vmatpush2.bf16.msra.mxu0 0
        %2676 = vmatprep.subr.bf16.mxu0 0
        %2677 = vmatpush2.bf16.msra.mxu0 0
        %2678 = vmatprep.subr.bf16.mxu0 0
        %2679 = vmatpush2.bf16.msra.mxu0 0
        %2680 = vmatprep.subr.bf16.mxu0 0
        %2681 = vmatpush2.bf16.msra.mxu0 0
        %2682 = vmatprep.mubr.bf16.mxu0 0
        %2683 = vmatmul.mubr.bf16.gmra.mxu0 %v2603
        %v2684 = vpop.f32.mrf.mxu0
        %v2685 = vadd.f32 %v2594, %v2684
        %v2686 = vpop.f32.mrf.mxu0
        %v2687 = vpop.f32.mrf.mxu0
        %v2688 = vadd.f32 %v2594, %v2687
        %v2689 = vpop.f32.mrf.mxu0
        %2690 = vmatprep.mubr.bf16.mxu0 0
        %2691 = vmatmul.mubr.bf16.gmra.mxu0 %v2606
        %v2692 = vpop.f32.mrf.mxu0
        %v2693 = vadd.f32 %v2594, %v2692
        %v2694 = vpop.f32.mrf.mxu0
        %v2695 = vpop.f32.mrf.mxu0
        %v2696 = vadd.f32 %v2594, %v2695
        %v2697 = vpop.f32.mrf.mxu0
        %2698 = vmatprep.mubr.bf16.mxu0 0
        %2699 = vmatmul.mubr.bf16.gmra.mxu0 %v2609
        %v2700 = vpop.f32.mrf.mxu0
        %v2701 = vadd.f32 %v2594, %v2700
        %v2702 = vpop.f32.mrf.mxu0
        %v2703 = vpop.f32.mrf.mxu0
        %v2704 = vadd.f32 %v2594, %v2703
        %v2705 = vpop.f32.mrf.mxu0
        %2706 = vmatprep.mubr.bf16.mxu0 0
        %2707 = vmatmul.mubr.bf16.gmra.mxu0 %v2612
        %v2708 = vpop.f32.mrf.mxu0
        %v2709 = vadd.f32 %v2594, %v2708
        %v2710 = vpop.f32.mrf.mxu0
        %v2711 = vpop.f32.mrf.mxu0
        %v2712 = vadd.f32 %v2594, %v2711
        %v2713 = vpop.f32.mrf.mxu0
        %2714 = vmatprep.mubr.bf16.mxu0 0
        %2715 = vmatmul.mubr.bf16.gmra.mxu0 %v2615
        %v2716 = vpop.f32.mrf.mxu0
        %v2717 = vadd.f32 %v2594, %v2716
        %v2718 = vpop.f32.mrf.mxu0
        %v2719 = vpop.f32.mrf.mxu0
        %v2720 = vadd.f32 %v2594, %v2719
        %v2721 = vpop.f32.mrf.mxu0
        %2722 = vmatprep.mubr.bf16.mxu0 0
        %2723 = vmatmul.mubr.bf16.gmra.mxu0 %v2618
        %v2724 = vpop.f32.mrf.mxu0
        %v2725 = vadd.f32 %v2594, %v2724
        %v2726 = vpop.f32.mrf.mxu0
        %v2727 = vpop.f32.mrf.mxu0
        %v2728 = vadd.f32 %v2594, %v2727
        %v2729 = vpop.f32.mrf.mxu0
        %2730 = vmatprep.mubr.bf16.mxu0 0
        %2731 = vmatmul.mubr.bf16.gmra.mxu0 %v2621
        %v2732 = vpop.f32.mrf.mxu0
        %v2733 = vadd.f32 %v2594, %v2732
        %v2734 = vpop.f32.mrf.mxu0
        %v2735 = vpop.f32.mrf.mxu0
        %v2736 = vadd.f32 %v2594, %v2735
        %v2737 = vpop.f32.mrf.mxu0
        %2738 = vmatprep.mubr.bf16.mxu0 0
        %2739 = vmatmul.mubr.bf16.gmra.mxu0 %v2624
        %v2740 = vpop.f32.mrf.mxu0
        %v2741 = vadd.f32 %v2594, %v2740
        %v2742 = vpop.f32.mrf.mxu0
        %v2743 = vpop.f32.mrf.mxu0
        %v2744 = vadd.f32 %v2594, %v2743
        %v2745 = vpop.f32.mrf.mxu0
        %2746 = vmatprep.mubr.bf16.mxu0 0
        %2747 = vmatmul.mubr.bf16.gmra.mxu0 %v2627
        %v2748 = vpop.f32.mrf.mxu0
        %v2749 = vadd.f32 %v2594, %v2748
        %v2750 = vpop.f32.mrf.mxu0
        %v2751 = vpop.f32.mrf.mxu0
        %v2752 = vadd.f32 %v2594, %v2751
        %v2753 = vpop.f32.mrf.mxu0
        %2754 = vmatprep.mubr.bf16.mxu0 0
        %2755 = vmatmul.mubr.bf16.gmra.mxu0 %v2630
        %v2756 = vpop.f32.mrf.mxu0
        %v2757 = vadd.f32 %v2594, %v2756
        %v2758 = vpop.f32.mrf.mxu0
        %v2759 = vpop.f32.mrf.mxu0
        %v2760 = vadd.f32 %v2594, %v2759
        %v2761 = vpop.f32.mrf.mxu0
        %2762 = vmatprep.mubr.bf16.mxu0 0
        %2763 = vmatmul.mubr.bf16.gmra.mxu0 %v2633
        %v2764 = vpop.f32.mrf.mxu0
        %v2765 = vadd.f32 %v2594, %v2764
        %v2766 = vpop.f32.mrf.mxu0
        %v2767 = vpop.f32.mrf.mxu0
        %v2768 = vadd.f32 %v2594, %v2767
        %v2769 = vpop.f32.mrf.mxu0
        %2770 = vmatprep.mubr.bf16.mxu0 0
        %2771 = vmatmul.mubr.bf16.gmra.mxu0 %v2636
        %v2772 = vpop.f32.mrf.mxu0
        %v2773 = vadd.f32 %v2594, %v2772
        %v2774 = vpop.f32.mrf.mxu0
        %v2775 = vpop.f32.mrf.mxu0
        %v2776 = vadd.f32 %v2594, %v2775
        %v2777 = vpop.f32.mrf.mxu0
        %2778 = vmatprep.mubr.bf16.mxu0 0
        %2779 = vmatmul.mubr.bf16.gmra.mxu0 %v2639
        %v2780 = vpop.f32.mrf.mxu0
        %v2781 = vadd.f32 %v2594, %v2780
        %v2782 = vpop.f32.mrf.mxu0
        %v2783 = vpop.f32.mrf.mxu0
        %v2784 = vadd.f32 %v2594, %v2783
        %v2785 = vpop.f32.mrf.mxu0
        %2786 = vmatprep.mubr.bf16.mxu0 0
        %2787 = vmatmul.mubr.bf16.gmra.mxu0 %v2642
        %v2788 = vpop.f32.mrf.mxu0
        %v2789 = vadd.f32 %v2594, %v2788
        %v2790 = vpop.f32.mrf.mxu0
        %v2791 = vpop.f32.mrf.mxu0
        %v2792 = vadd.f32 %v2594, %v2791
        %v2793 = vpop.f32.mrf.mxu0
        %2794 = vmatprep.mubr.bf16.mxu0 0
        %2795 = vmatmul.mubr.bf16.gmra.mxu0 %v2645
        %v2796 = vpop.f32.mrf.mxu0
        %v2797 = vadd.f32 %v2594, %v2796
        %v2798 = vpop.f32.mrf.mxu0
        %v2799 = vpop.f32.mrf.mxu0
        %v2800 = vadd.f32 %v2594, %v2799
        %v2801 = vpop.f32.mrf.mxu0
        %2802 = vmatprep.mubr.bf16.mxu0 0
        %2803 = vmatmul.mubr.bf16.gmra.mxu0 %v2648
        %v2804 = vpop.f32.mrf.mxu0
        %v2805 = vadd.f32 %v2594, %v2804
        %v2806 = vpop.f32.mrf.mxu0
        %v2807 = vpop.f32.mrf.mxu0
        %v2808 = vadd.f32 %v2594, %v2807
        %v2809 = vpop.f32.mrf.mxu0
        %2810 = vdwg.mxu0
        %v2811 = vxor.u32 %v2685, 2147483648
        %v2812 = vxor.u32 %v2688, 2147483648
        %v2813 = vxor.u32 %v2693, 2147483648
        %v2814 = vxor.u32 %v2696, 2147483648
        %v2815 = vxor.u32 %v2701, 2147483648
        %v2816 = vxor.u32 %v2704, 2147483648
        %v2817 = vxor.u32 %v2709, 2147483648
        %v2818 = vxor.u32 %v2712, 2147483648
        %v2819 = vxor.u32 %v2717, 2147483648
        %v2820 = vxor.u32 %v2720, 2147483648
        %v2821 = vxor.u32 %v2725, 2147483648
        %v2822 = vxor.u32 %v2728, 2147483648
        %v2823 = vxor.u32 %v2733, 2147483648
        %v2824 = vxor.u32 %v2736, 2147483648
        %v2825 = vxor.u32 %v2741, 2147483648
        %v2826 = vxor.u32 %v2744, 2147483648
        %v2827 = vxor.u32 %v2749, 2147483648
        %v2828 = vxor.u32 %v2752, 2147483648
        %v2829 = vxor.u32 %v2757, 2147483648
        %v2830 = vxor.u32 %v2760, 2147483648
        %v2831 = vxor.u32 %v2765, 2147483648
        %v2832 = vxor.u32 %v2768, 2147483648
        %v2833 = vxor.u32 %v2773, 2147483648
        %v2834 = vxor.u32 %v2776, 2147483648
        %v2835 = vxor.u32 %v2781, 2147483648
        %v2836 = vxor.u32 %v2784, 2147483648
        %v2837 = vxor.u32 %v2789, 2147483648
        %v2838 = vxor.u32 %v2792, 2147483648
        %v2839 = vxor.u32 %v2797, 2147483648
        %v2840 = vxor.u32 %v2800, 2147483648
        %v2841 = vxor.u32 %v2805, 2147483648
        %v2842 = vxor.u32 %v2808, 2147483648
        %v2843 = vmul.f32 %v2811, 1.442695
        %v2844 = vpow.pop %v2843
        %v2845 = vmul.f32 %v2812, 1.442695
        %v2846 = vpow.pop %v2845
        %v2847 = vmul.f32 %v2813, 1.442695
        %v2848 = vpow.pop %v2847
        %v2849 = vmul.f32 %v2814, 1.442695
        %v2850 = vpow.pop %v2849
        %v2851 = vmul.f32 %v2815, 1.442695
        %v2852 = vpow.pop %v2851
        %v2853 = vmul.f32 %v2816, 1.442695
        %v2854 = vpow.pop %v2853
        %v2855 = vmul.f32 %v2817, 1.442695
        %v2856 = vpow.pop %v2855
        %v2857 = vmul.f32 %v2818, 1.442695
        %v2858 = vpow.pop %v2857
        %v2859 = vmul.f32 %v2819, 1.442695
        %v2860 = vpow.pop %v2859
        %v2861 = vmul.f32 %v2820, 1.442695
        %v2862 = vpow.pop %v2861
        %v2863 = vmul.f32 %v2821, 1.442695
        %v2864 = vpow.pop %v2863
        %v2865 = vmul.f32 %v2822, 1.442695
        %v2866 = vpow.pop %v2865
        %v2867 = vmul.f32 %v2823, 1.442695
        %v2868 = vpow.pop %v2867
        %v2869 = vmul.f32 %v2824, 1.442695
        %v2870 = vpow.pop %v2869
        %v2871 = vmul.f32 %v2825, 1.442695
        %v2872 = vpow.pop %v2871
        %v2873 = vmul.f32 %v2826, 1.442695
        %v2874 = vpow.pop %v2873
        %v2875 = vmul.f32 %v2827, 1.442695
        %v2876 = vpow.pop %v2875
        %v2877 = vmul.f32 %v2828, 1.442695
        %v2878 = vpow.pop %v2877
        %v2879 = vmul.f32 %v2829, 1.442695
        %v2880 = vpow.pop %v2879
        %v2881 = vmul.f32 %v2830, 1.442695
        %v2882 = vpow.pop %v2881
        %v2883 = vmul.f32 %v2831, 1.442695
        %v2884 = vpow.pop %v2883
        %v2885 = vmul.f32 %v2832, 1.442695
        %v2886 = vpow.pop %v2885
        %v2887 = vmul.f32 %v2833, 1.442695
        %v2888 = vpow.pop %v2887
        %v2889 = vmul.f32 %v2834, 1.442695
        %v2890 = vpow.pop %v2889
        %v2891 = vmul.f32 %v2835, 1.442695
        %v2892 = vpow.pop %v2891
        %v2893 = vmul.f32 %v2836, 1.442695
        %v2894 = vpow.pop %v2893
        %v2895 = vmul.f32 %v2837, 1.442695
        %v2896 = vpow.pop %v2895
        %v2897 = vmul.f32 %v2838, 1.442695
        %v2898 = vpow.pop %v2897
        %v2899 = vmul.f32 %v2839, 1.442695
        %v2900 = vpow.pop %v2899
        %v2901 = vmul.f32 %v2840, 1.442695
        %v2902 = vpow.pop %v2901
        %v2903 = vmul.f32 %v2841, 1.442695
        %v2904 = vpow.pop %v2903
        %v2905 = vmul.f32 %v2842, 1.442695
        %v2906 = vpow.pop %v2905
        %v2907 = vadd.f32 %v2844, 1.0
        %v2908 = vadd.f32 %v2846, 1.0
        %v2909 = vadd.f32 %v2848, 1.0
        %v2910 = vadd.f32 %v2850, 1.0
        %v2911 = vadd.f32 %v2852, 1.0
        %v2912 = vadd.f32 %v2854, 1.0
        %v2913 = vadd.f32 %v2856, 1.0
        %v2914 = vadd.f32 %v2858, 1.0
        %v2915 = vadd.f32 %v2860, 1.0
        %v2916 = vadd.f32 %v2862, 1.0
        %v2917 = vadd.f32 %v2864, 1.0
        %v2918 = vadd.f32 %v2866, 1.0
        %v2919 = vadd.f32 %v2868, 1.0
        %v2920 = vadd.f32 %v2870, 1.0
        %v2921 = vadd.f32 %v2872, 1.0
        %v2922 = vadd.f32 %v2874, 1.0
        %v2923 = vadd.f32 %v2876, 1.0
        %v2924 = vadd.f32 %v2878, 1.0
        %v2925 = vadd.f32 %v2880, 1.0
        %v2926 = vadd.f32 %v2882, 1.0
        %v2927 = vadd.f32 %v2884, 1.0
        %v2928 = vadd.f32 %v2886, 1.0
        %v2929 = vadd.f32 %v2888, 1.0
        %v2930 = vadd.f32 %v2890, 1.0
        %v2931 = vadd.f32 %v2892, 1.0
        %v2932 = vadd.f32 %v2894, 1.0
        %v2933 = vadd.f32 %v2896, 1.0
        %v2934 = vadd.f32 %v2898, 1.0
        %v2935 = vadd.f32 %v2900, 1.0
        %v2936 = vadd.f32 %v2902, 1.0
        %v2937 = vadd.f32 %v2904, 1.0
        %v2938 = vadd.f32 %v2906, 1.0
        %v2939 = vrcp.pop %v2907
        %v2940 = vmul.f32 1.0, %v2939
        %v2941 = vrcp.pop %v2908
        %v2942 = vmul.f32 1.0, %v2941
        %v2943 = vrcp.pop %v2909
        %v2944 = vmul.f32 1.0, %v2943
        %v2945 = vrcp.pop %v2910
        %v2946 = vmul.f32 1.0, %v2945
        %v2947 = vrcp.pop %v2911
        %v2948 = vmul.f32 1.0, %v2947
        %v2949 = vrcp.pop %v2912
        %v2950 = vmul.f32 1.0, %v2949
        %v2951 = vrcp.pop %v2913
        %v2952 = vmul.f32 1.0, %v2951
        %v2953 = vrcp.pop %v2914
        %v2954 = vmul.f32 1.0, %v2953
        %v2955 = vrcp.pop %v2915
        %v2956 = vmul.f32 1.0, %v2955
        %v2957 = vrcp.pop %v2916
        %v2958 = vmul.f32 1.0, %v2957
        %v2959 = vrcp.pop %v2917
        %v2960 = vmul.f32 1.0, %v2959
        %v2961 = vrcp.pop %v2918
        %v2962 = vmul.f32 1.0, %v2961
        %v2963 = vrcp.pop %v2919
        %v2964 = vmul.f32 1.0, %v2963
        %v2965 = vrcp.pop %v2920
        %v2966 = vmul.f32 1.0, %v2965
        %v2967 = vrcp.pop %v2921
        %v2968 = vmul.f32 1.0, %v2967
        %v2969 = vrcp.pop %v2922
        %v2970 = vmul.f32 1.0, %v2969
        %v2971 = vrcp.pop %v2923
        %v2972 = vmul.f32 1.0, %v2971
        %v2973 = vrcp.pop %v2924
        %v2974 = vmul.f32 1.0, %v2973
        %v2975 = vrcp.pop %v2925
        %v2976 = vmul.f32 1.0, %v2975
        %v2977 = vrcp.pop %v2926
        %v2978 = vmul.f32 1.0, %v2977
        %v2979 = vrcp.pop %v2927
        %v2980 = vmul.f32 1.0, %v2979
        %v2981 = vrcp.pop %v2928
        %v2982 = vmul.f32 1.0, %v2981
        %v2983 = vrcp.pop %v2929
        %v2984 = vmul.f32 1.0, %v2983
        %v2985 = vrcp.pop %v2930
        %v2986 = vmul.f32 1.0, %v2985
        %v2987 = vrcp.pop %v2931
        %v2988 = vmul.f32 1.0, %v2987
        %v2989 = vrcp.pop %v2932
        %v2990 = vmul.f32 1.0, %v2989
        %v2991 = vrcp.pop %v2933
        %v2992 = vmul.f32 1.0, %v2991
        %v2993 = vrcp.pop %v2934
        %v2994 = vmul.f32 1.0, %v2993
        %v2995 = vrcp.pop %v2935
        %v2996 = vmul.f32 1.0, %v2995
        %v2997 = vrcp.pop %v2936
        %v2998 = vmul.f32 1.0, %v2997
        %v2999 = vrcp.pop %v2937
        %v3000 = vmul.f32 1.0, %v2999
        %v3001 = vrcp.pop %v2938
        %v3002 = vmul.f32 1.0, %v3001
        %3003 = vst.msk [vmem:[%s566] sm:$0xff] %vm798, %v2940
        %3004 = vst.msk [vmem:[%s566 + $0x8] sm:$0xff] %vm798, %v2942
        %3005 = vst.msk [vmem:[%s566 + $0x10] sm:$0xff] %vm798, %v2944
        %3006 = vst.msk [vmem:[%s566 + $0x18] sm:$0xff] %vm798, %v2946
        %3007 = vst.msk [vmem:[%s566 + $0x20] sm:$0xff] %vm798, %v2948
        %3008 = vst.msk [vmem:[%s566 + $0x28] sm:$0xff] %vm798, %v2950
        %3009 = vst.msk [vmem:[%s566 + $0x30] sm:$0xff] %vm798, %v2952
        %3010 = vst.msk [vmem:[%s566 + $0x38] sm:$0xff] %vm798, %v2954
        %3011 = vst.msk [vmem:[%s566 + $0x40] sm:$0xff] %vm798, %v2956
        %3012 = vst.msk [vmem:[%s566 + $0x48] sm:$0xff] %vm798, %v2958
        %3013 = vst.msk [vmem:[%s566 + $0x50] sm:$0xff] %vm798, %v2960
        %3014 = vst.msk [vmem:[%s566 + $0x58] sm:$0xff] %vm798, %v2962
        %3015 = vst.msk [vmem:[%s566 + $0x60] sm:$0xff] %vm798, %v2964
        %3016 = vst.msk [vmem:[%s566 + $0x68] sm:$0xff] %vm798, %v2966
        %3017 = vst.msk [vmem:[%s566 + $0x70] sm:$0xff] %vm798, %v2968
        %3018 = vst.msk [vmem:[%s566 + $0x78] sm:$0xff] %vm798, %v2970
        %3019 = vst.msk [vmem:[%s566 + $0x80] sm:$0xff] %vm798, %v2972
        %3020 = vst.msk [vmem:[%s566 + $0x88] sm:$0xff] %vm798, %v2974
        %3021 = vst.msk [vmem:[%s566 + $0x90] sm:$0xff] %vm798, %v2976
        %3022 = vst.msk [vmem:[%s566 + $0x98] sm:$0xff] %vm798, %v2978
        %3023 = vst.msk [vmem:[%s566 + $0xa0] sm:$0xff] %vm798, %v2980
        %3024 = vst.msk [vmem:[%s566 + $0xa8] sm:$0xff] %vm798, %v2982
        %3025 = vst.msk [vmem:[%s566 + $0xb0] sm:$0xff] %vm798, %v2984
        %3026 = vst.msk [vmem:[%s566 + $0xb8] sm:$0xff] %vm798, %v2986
        %3027 = vst.msk [vmem:[%s566 + $0xc0] sm:$0xff] %vm798, %v2988
        %3028 = vst.msk [vmem:[%s566 + $0xc8] sm:$0xff] %vm798, %v2990
        %3029 = vst.msk [vmem:[%s566 + $0xd0] sm:$0xff] %vm798, %v2992
        %3030 = vst.msk [vmem:[%s566 + $0xd8] sm:$0xff] %vm798, %v2994
        %3031 = vst.msk [vmem:[%s566 + $0xe0] sm:$0xff] %vm798, %v2996
        %3032 = vst.msk [vmem:[%s566 + $0xe8] sm:$0xff] %vm798, %v2998
        %3033 = vst.msk [vmem:[%s566 + $0xf0] sm:$0xff] %vm798, %v3000
        %3034 = vst.msk [vmem:[%s566 + $0xf8] sm:$0xff] %vm798, %v3002
        %p3035 = scmp.lt.s32.totalorder %s33, 1
        %s3036 = scalar_select %p3035, %s33, 1
        %p3037 = scmp.lt.s32.totalorder %s34, 1
        %s3038 = scalar_select %p3037, %s34, 1
        %s3039 = smul.addr %s3038, 32
        %s3040 = smul.addr %s3036, 64
        %s3041 = sadd.s32 %s3039, %s3040
        %s3042 = smul.addr %s3041, 8
        %s3043 = scalar_lea.vmem %s11, %s3042
        // Predicated region
        $region81: #{tpu_custom_call.1} parent=63 // pred_check
          %p3044 = pneg %p329
        $region82: #{tpu_custom_call.1} parent=63 // pred_check_branch
          %3046 = sbr.rel (%p3044) target = $region84
        $region83: #{tpu_custom_call.1} parent=63 // pred_region
          _
        $region84: #{tpu_custom_call.1} parent=63 // pred_fallthru
          _
      $region64: #{tpu_custom_call.1} parent=5 // pred_fallthru
        _
      %p3047 = scmp.le.s32.totalorder 2, %s24
      // Predicated region
      $region85: #{tpu_custom_call.1} parent=5 // pred_check
        %p3048 = pneg %p3047
      $region86: #{tpu_custom_call.1} parent=5 // pred_check_branch
        %3050 = sbr.rel (%p3048) target = $region88
      $region87: #{tpu_custom_call.1} parent=5 // pred_region
        %s3051 = ssub.s32 %s24, 2
        // Predicated region
        $region89: #{tpu_custom_call.1} parent=87 // pred_check
          %p3052 = pneg %p335
        $region90: #{tpu_custom_call.1} parent=87 // pred_check_branch
          %3054 = sbr.rel (%p3052) target = $region92
        $region91: #{tpu_custom_call.1} parent=87 // pred_region
          %p3055 = scmp.lt.s32.totalorder %s35, 1
          %s3056 = scalar_select %p3055, %s35, 1
          %p3057 = scmp.lt.s32.totalorder %s36, 1
          %s3058 = scalar_select %p3057, %s36, 1
          %s3059 = smul.addr %s3058, 32
          %s3060 = smul.addr %s3056, 64
          %s3061 = sadd.s32 %s3059, %s3060
          %s3062 = smul.addr %s3061, 8
          %s3063 = scalar_lea.vmem %s11, %s3062
        $region92: #{tpu_custom_call.1} parent=87 // pred_fallthru
          _
      $region88: #{tpu_custom_call.1} parent=5 // pred_fallthru
        _
    $region6: #{tpu_custom_call.1} parent=1 // loop_footer
      %s28 = sadd.s32 1, %s24
    $region7: #{tpu_custom_call.1} parent=1 // loop_footer_branch
      %23 = sbr.rel target = $region3
    $region8: #{tpu_custom_call.1} parent=1 // loop_exit
      _
    %3064 = vsyncpa [#allocation4], 1
    %s3065 = scalar_lea.sflag [#allocation4], 1
    %3066 = vsyncpa %s3065, 1
    %3067 = vsyncpa [#allocation6], 1
    %s3068 = scalar_lea.sflag [#allocation6], 1
    %3069 = vsyncpa %s3068, 1
    %3070 = vsyncpa [#allocation9], 1

</llo_original>
